<compile_context>
chip_gen: v6e
topology: v6e:2x2x1
jax: 0.10.0
libtpu: 0.0.40
codegen_flags: <defaults>
</compile_context>

<pallas_src>
import math
from functools import partial

import jax
import jax.numpy as jnp
from jax import lax
from jax.experimental import pallas as pl
from jax.experimental.pallas import tpu as pltpu


# ---------------------------------------------------------------------------
# Pallas kernel: both branches, all heads, residual + the two LayerNorms.
# ---------------------------------------------------------------------------
def _dual_attention_kernel(xlm_ref, qtok_ref, wq_ref, wk_ref, wv_ref, wo_ref,
                           bias_ref, sumk_ref, expv_ref, segln_ref,
                           out_ref,
                           kf_s, vf_s, q_s, o_s,
                           *, bt, nk, nk_p, eps):
    f32 = jnp.float32
    hk = wq_ref.shape[1]          # 2*h*d_k (both branches)
    hv = wv_ref.shape[1]          # 2*h*d_v
    do2 = wo_ref.shape[1]         # 2*d_out

    wq = wq_ref[...]
    wk = wk_ref[...]
    wv = wv_ref[...]
    wo = wo_ref[...]
    sumk = sumk_ref[...]          # (hk, 2h)  head segment-sum
    expv = expv_ref[...]          # (2h, hv)  head -> value-lane expansion
    segln = segln_ref[...]        # (do2, do2) per-branch averaging operator
    bq = bias_ref[0:1, 0:hk]
    bk = bias_ref[1:2, 0:hk]
    bv = bias_ref[2:3, 0:hv]
    bo = bias_ref[3:4, 0:do2]
    gamma = bias_ref[4:5, 0:do2]
    beta = bias_ref[5:6, 0:do2]

    xf = xlm_ref[...]             # (bt*nk_p, 2*d_in), compute dtype (bf16/f32)
    qtok = qtok_ref[...]          # (bt, 2*d_in), f32 (residual needs full precision)

    # --- Batched projections: one wide MXU matmul each per grid step. ------
    kf_s[...] = jnp.dot(xf, wk, preferred_element_type=f32) + bk    # (bt*nk_p, hk)
    vf_s[...] = jnp.dot(xf, wv, preferred_element_type=f32) + bv    # (bt*nk_p, hv)
    q_s[...] = jnp.dot(qtok.astype(wq.dtype), wq,
                       preferred_element_type=f32) + bq             # (bt, hk)

    # Pad-token mask (token rows >= nk are zero padding -> excluded from softmax).
    tok = lax.broadcasted_iota(jnp.int32, (nk_p, 1), 0)
    smask = jnp.where(tok < nk, 0.0, -1e30).astype(f32)

    # --- Per-batch attention core (tiny: scores / softmax / PV only). ------
    def attend_one(i, r0):
        kfi = kf_s[pl.ds(r0, nk_p), :]                    # (nk_p, hk) f32
        vfi = vf_s[pl.ds(r0, nk_p), :]                    # (nk_p, hv) f32
        qi = q_s[pl.ds(i, 1), :]                          # (1, hk)    f32
        # per-head scores: segment-sum of q*k over each head's d_k lanes
        s = jnp.dot(qi * kfi, sumk, preferred_element_type=f32) + smask   # (nk_p, 2h)
        m = jnp.max(s, axis=0, keepdims=True)
        e = jnp.exp(s - m)
        p = e * pl.reciprocal(jnp.sum(e, axis=0, keepdims=True), approx=True)
        # weighted value sum: expand head probs over their d_v lanes, reduce tokens
        pv = jnp.dot(p, expv, preferred_element_type=f32) * vfi           # (nk_p, hv)
        o_s[pl.ds(i, 1), :] = jnp.sum(pv, axis=0, keepdims=True)          # (1, hv)

    if bt <= 16:
        for i in range(bt):                       # fully static, aligned slices
            attend_one(i, i * nk_p)
    else:
        def loop_body(i, carry):
            attend_one(i, pl.multiple_of(i * nk_p, nk_p))
            return carry
        lax.fori_loop(0, bt, loop_body, 0, unroll=4)

    # --- Batched epilogue: output proj + residual + dual LayerNorm, 1 store.
    o_all = o_s[...]                                                  # (bt, hv)
    proj = jnp.dot(o_all.astype(wo.dtype), wo,
                   preferred_element_type=f32) + bo                   # (bt, do2)
    res = qtok + proj                                                 # residual (d_in == d_out)
    mu = jnp.dot(res, segln, preferred_element_type=f32)              # per-branch means
    cen = res - mu
    var = jnp.dot(cen * cen, segln, preferred_element_type=f32)       # per-branch variances
    out_ref[...] = cen * lax.rsqrt(var + eps) * gamma + beta


# ---------------------------------------------------------------------------
# Tiling choice (per-generation grid tuning + VMEM budget).
# ---------------------------------------------------------------------------
def _pick_tiling(b, bytes_per_row, *, cap=256, vmem_budget=8 << 20):
    """Return (b_tile, num_grid_steps); batch is padded to their product."""
    try:
        kind = jax.devices()[0].device_kind.lower()
    except Exception:
        kind = ""
    two_cores = "v7" in kind                      # v7x: 2 TensorCores / chip
    cap = min(cap, max(8, vmem_budget // max(1, bytes_per_row)))
    cap = max(8, (cap // 8) * 8)
    if b <= cap and not (two_cores and b >= 16):
        return b, 1                               # single step: no per-step overhead
    # multi-step: b_tile must be a multiple of 8 (output block-shape constraint)
    want = pl.cdiv(b, 2) if (two_cores and b >= 16) else cap
    bt = min(cap, max(8, ((want + 7) // 8) * 8))
    return bt, pl.cdiv(b, bt)


# ---------------------------------------------------------------------------
# Wrapper: prep + padding + pallas_call.
# ---------------------------------------------------------------------------
def fused_dual_attention(xlm, kp, *, compute_dtype=jnp.bfloat16):
    """xlm: (b, nk, 2*d_in) f32 tokens [x | loss_map]. Returns (b, 2*d_out) f32."""
    b, nk, d2 = xlm.shape
    hk = kp["wq"].shape[1]
    hv = kp["wv"].shape[1]
    do2 = kp["wo"].shape[1]
    assert d2 == do2, "residual skip requires d_in == d_out"

    nk_p = ((nk + 7) // 8) * 8
    itemsize = jnp.dtype(compute_dtype).itemsize
    bytes_per_row = nk_p * (2 * d2 * itemsize + (hk + hv) * 4) + (hk + hv + d2 + do2) * 4
    bt, steps = _pick_tiling(b, int(bytes_per_row))
    b_pad = bt * steps

    qtok = xlm[:, 0, :]                                       # raw mean tokens (residual input)
    qtok = jnp.pad(qtok, ((0, b_pad - b), (0, 0)))            # (b_pad, d2) f32
    xlm_p = jnp.pad(xlm, ((0, b_pad - b), (0, nk_p - nk), (0, 0)))
    xlm_flat = xlm_p.reshape(b_pad * nk_p, d2).astype(compute_dtype)

    wq = kp["wq"].astype(compute_dtype)
    wk = kp["wk"].astype(compute_dtype)
    wv = kp["wv"].astype(compute_dtype)
    wo = kp["wo"].astype(compute_dtype)

    kernel = partial(_dual_attention_kernel, bt=bt, nk=nk, nk_p=nk_p, eps=1e-5)

    def _full(a):  # resident constant block
        return pl.BlockSpec(a.shape, lambda i: (0, 0))

    out = pl.pallas_call(
        kernel,
        out_shape=jax.ShapeDtypeStruct((b_pad, do2), jnp.float32),
        grid_spec=pltpu.PrefetchScalarGridSpec(
            num_scalar_prefetch=0,
            grid=(steps,),
            in_specs=[
                pl.BlockSpec((bt * nk_p, d2), lambda i: (i, 0)),   # tokens
                pl.BlockSpec((bt, d2), lambda i: (i, 0)),          # mean tokens (f32)
                _full(wq), _full(wk), _full(wv), _full(wo),
                _full(kp["bias_pack"]), _full(kp["sumk"]),
                _full(kp["expv"]), _full(kp["segln"]),
            ],
            out_specs=pl.BlockSpec((bt, do2), lambda i: (i, 0)),
            scratch_shapes=[
                pltpu.VMEM((bt * nk_p, hk), jnp.float32),   # kf
                pltpu.VMEM((bt * nk_p, hv), jnp.float32),   # vf
                pltpu.VMEM((bt, hk), jnp.float32),          # q
                pltpu.VMEM((bt, hv), jnp.float32),          # per-batch attention out
            ],
        ),
        compiler_params=pltpu.CompilerParams(
            dimension_semantics=("parallel",)),
    )(xlm_flat, qtok, wq, wk, wv, wo,
      kp["bias_pack"], kp["sumk"], kp["expv"], kp["segln"])
    return out[:b]


def prep_tokens(fmap_nchw, pos_emb):
    """flatten(2) -> permute -> prepend mean token -> add positional embedding."""
    b, c, H, W = fmap_nchw.shape
    x = fmap_nchw.reshape(b, c, H * W).transpose(0, 2, 1)               # (b, HW, c)
    x = jnp.concatenate([x.mean(axis=1, keepdims=True), x], axis=1)     # (b, HW+1, c)
    return x + pos_emb[None, :, :]


def multi_head_map_attention_v2(feature_map, loss_map, pos_emb, kp, *,
                                compute_dtype=jnp.bfloat16):
    x = prep_tokens(feature_map, pos_emb)        # (b, nk, d_in)
    lm = prep_tokens(loss_map, pos_emb)          # (b, nk, d_in)
    xlm = jnp.concatenate([x, lm], axis=-1)      # (b, nk, 2*d_in) shared key/value slab
    # torch.cat([out1.squeeze(), out2.squeeze()], dim=-1) for batch > 1
    return fused_dual_attention(xlm, kp, compute_dtype=compute_dtype)


# ---------------------------------------------------------------------------
# Parameter construction / combination (host-side, done once).
# ---------------------------------------------------------------------------
def _xavier_uniform(key, fan_in, fan_out):
    bound = math.sqrt(6.0 / (fan_in + fan_out))
    return jax.random.uniform(key, (fan_in, fan_out), jnp.float32, -bound, bound)


def make_branch_params(key, d_in, d_out, d_k, d_v, h):
    # PyTorch init zeros all biases; randomized (small) here so the self-check
    # exercises every parameter path of the kernel.
    ks = jax.random.split(key, 11)
    bias = lambda k, n: 0.1 * jax.random.normal(k, (n,), jnp.float32)
    return {
        "wq": _xavier_uniform(ks[0], d_in, h * d_k), "bq": bias(ks[5], h * d_k),
        "wk1": _xavier_uniform(ks[1], d_in, h * d_k), "bk1": bias(ks[6], h * d_k),
        "wk2": _xavier_uniform(ks[2], d_in, h * d_k), "bk2": bias(ks[7], h * d_k),
        "wv": _xavier_uniform(ks[3], d_in, h * d_v), "bv": bias(ks[8], h * d_v),
        "wo": _xavier_uniform(ks[4], h * d_v, d_out), "bo": bias(ks[9], d_out),
        "gamma": 1.0 + 0.1 * jax.random.normal(ks[10], (d_out,), jnp.float32),
        "beta": jnp.zeros((d_out,), jnp.float32),
    }


def build_kernel_params(params, d_in, d_out, d_k, d_v, h):
    """Combine both branches' weights into block-diagonal / stacked matrices,
    pack small vectors into one (6, W) array, and build the constant segment
    matrices used by the kernel."""
    a1, a2 = params["att1"], params["att2"]
    h2 = 2 * h
    scale = 1.0 / math.sqrt(2.0 * d_k)                   # folded into wq / bq
    zq = jnp.zeros((d_in, h * d_k), jnp.float32)
    zv = jnp.zeros((d_in, h * d_v), jnp.float32)
    zo = jnp.zeros((h * d_v, d_out), jnp.float32)
    wq = jnp.block([[a1["wq"], zq], [zq, a2["wq"]]]) * scale              # (2d_in, 2hdk)
    wk = jnp.block([[a1["wk1"], a2["wk1"]], [a1["wk2"], a2["wk2"]]])       # (2d_in, 2hdk)
    wv = jnp.block([[a1["wv"], zv], [zv, a2["wv"]]])                       # (2d_in, 2hdv)
    wo = jnp.block([[a1["wo"], zo], [zo, a2["wo"]]])                       # (2hdv, 2dout)
    bq = jnp.concatenate([a1["bq"], a2["bq"]]) * scale
    bk = jnp.concatenate([a1["bk1"] + a1["bk2"], a2["bk1"] + a2["bk2"]])
    bv = jnp.concatenate([a1["bv"], a2["bv"]])
    bo = jnp.concatenate([a1["bo"], a2["bo"]])
    gamma = jnp.concatenate([a1["gamma"], a2["gamma"]])
    beta = jnp.concatenate([a1["beta"], a2["beta"]])
    width = max(h2 * d_k, h2 * d_v, 2 * d_out)
    pad = lambda v: jnp.pad(v, (0, width - v.shape[0]))
    bias_pack = jnp.stack([pad(bq), pad(bk), pad(bv), pad(bo), pad(gamma), pad(beta)])
    eye = jnp.eye(h2, dtype=jnp.float32)
    sumk = jnp.repeat(eye, d_k, axis=0)          # (h2*d_k, h2): per-head lane segment-sum
    expv = jnp.repeat(eye, d_v, axis=1)          # (h2, h2*d_v): head -> value-lane expand
    blk = jnp.full((d_out, d_out), 1.0 / d_out, jnp.float32)
    zsl = jnp.zeros((d_out, d_out), jnp.float32)
    segln = jnp.block([[blk, zsl], [zsl, blk]])  # per-branch mean operator
    return {"wq": wq, "wk": wk, "wv": wv, "wo": wo, "bias_pack": bias_pack,
            "sumk": sumk, "expv": expv, "segln": segln}


# ---------------------------------------------------------------------------
# Pure-JAX reference (mirrors the PyTorch module) for self-verification.
# ---------------------------------------------------------------------------
def _reference_branch(q, keys1, keys2, values, pr, *, h, d_k, d_v, eps=1e-5):
    b, nq, _ = q.shape
    nk = keys1.shape[1]
    qp = (q @ pr["wq"] + pr["bq"]).reshape(b, nq, h, d_k).transpose(0, 2, 1, 3)
    k1 = (keys1 @ pr["wk1"] + pr["bk1"]).reshape(b, nk, h, d_k).transpose(0, 2, 3, 1)
    k2 = (keys2 @ pr["wk2"] + pr["bk2"]).reshape(b, nk, h, d_k).transpose(0, 2, 3, 1)
    v = (values @ pr["wv"] + pr["bv"]).reshape(b, nk, h, d_v).transpose(0, 2, 1, 3)
    att = (qp @ k1 + qp @ k2) / math.sqrt(2.0 * d_k)
    att = jax.nn.softmax(att, axis=-1)
    out = (att @ v).transpose(0, 2, 1, 3).reshape(b, nq, h * d_v)
    out = out @ pr["wo"] + pr["bo"]
    res = q + out
    mu = res.mean(-1, keepdims=True)
    var = ((res - mu) ** 2).mean(-1, keepdims=True)
    return (res - mu) / jnp.sqrt(var + eps) * pr["gamma"] + pr["beta"]


def reference_forward(feature_map, loss_map, params, *, h, d_k, d_v):
    x = prep_tokens(feature_map, params["pos_emb"])
    lm = prep_tokens(loss_map, params["pos_emb"])
    o1 = _reference_branch(x[:, :1], x, lm, x, params["att1"], h=h, d_k=d_k, d_v=d_v)
    o2 = _reference_branch(lm[:, :1], x, lm, lm, params["att2"], h=h, d_k=d_k, d_v=d_v)
    return jnp.concatenate([o1[:, 0, :], o2[:, 0, :]], axis=-1)


if __name__ == "__main__":
    # Small config consistent with the module (d_in == d_out required by residual).
    b, d_in, d_out, d_k, d_v, h, spacial_dim = 2, 32, 32, 8, 8, 4, 4
    nk = spacial_dim ** 2 + 1

    root = jax.random.PRNGKey(0)
    k_fm, k_lm, k_pos, k_a1, k_a2 = jax.random.split(root, 5)
    feature_map = jax.random.normal(k_fm, (b, d_in, spacial_dim, spacial_dim), jnp.float32)
    loss_map = jax.random.normal(k_lm, (b, d_in, spacial_dim, spacial_dim), jnp.float32)

    params = {
        "pos_emb": jax.random.normal(k_pos, (nk, d_in), jnp.float32) / math.sqrt(d_in),
        "att1": make_branch_params(k_a1, d_in, d_out, d_k, d_v, h),
        "att2": make_branch_params(k_a2, d_in, d_out, d_k, d_v, h),
    }
    kp = build_kernel_params(params, d_in, d_out, d_k, d_v, h)

    ref = reference_forward(feature_map, loss_map, params, h=h, d_k=d_k, d_v=d_v)

    # f32 variant checks the kernel algebra tightly; bf16 is the fast MXU path
    # recommended by the perf review (softmax/LN stats stay in f32 either way).
    for cdt, tol in ((jnp.float32, 1e-2), (jnp.bfloat16, 5e-2)):
        fwd = jax.jit(partial(multi_head_map_attention_v2, compute_dtype=cdt))
        out = fwd(feature_map, loss_map, params["pos_emb"], kp)
        jax.block_until_ready(out)
        assert out.shape == (b, 2 * d_out), out.shape
        max_err = float(jnp.max(jnp.abs(out - ref)))
        assert max_err <= tol, (str(cdt), max_err)
    print("KERNEL_OK")
</pallas_src>

<mosaic_0001>
module attributes {stable_mosaic.version = 11 : i64} {
  func.func @_dual_attention_kernel(%arg0: i32, %arg1: memref<48x64xf32, #tpu.memory_space<vmem>>, %arg2: memref<2x64xf32, #tpu.memory_space<vmem>>, %arg3: memref<64x64xf32, #tpu.memory_space<vmem>>, %arg4: memref<64x64xf32, #tpu.memory_space<vmem>>, %arg5: memref<64x64xf32, #tpu.memory_space<vmem>>, %arg6: memref<64x64xf32, #tpu.memory_space<vmem>>, %arg7: memref<6x64xf32, #tpu.memory_space<vmem>>, %arg8: memref<64x8xf32, #tpu.memory_space<vmem>>, %arg9: memref<8x64xf32, #tpu.memory_space<vmem>>, %arg10: memref<64x64xf32, #tpu.memory_space<vmem>>, %arg11: memref<2x64xf32, #tpu.memory_space<vmem>>, %arg12: memref<48x64xf32, #tpu.memory_space<vmem>>, %arg13: memref<48x64xf32, #tpu.memory_space<vmem>>, %arg14: memref<2x64xf32, #tpu.memory_space<vmem>>, %arg15: memref<2x64xf32, #tpu.memory_space<vmem>>) attributes {dimension_semantics = [#tpu.dimension_semantics<parallel>], iteration_bounds = array<i64: 1>, scalar_prefetch = 0 : i64, scratch_operands = 4 : i64, tpu.core_type = #tpu.core_type<tc>, window_params = [{transform_indices = @transform_0, window_bounds = array<i64: 48, 64>}, {transform_indices = @transform_1, window_bounds = array<i64: 2, 64>}, {pipeline_mode = #tpu.pipeline_mode<synchronous>, transform_indices = @transform_2, window_bounds = array<i64: 64, 64>}, {pipeline_mode = #tpu.pipeline_mode<synchronous>, transform_indices = @transform_3, window_bounds = array<i64: 64, 64>}, {pipeline_mode = #tpu.pipeline_mode<synchronous>, transform_indices = @transform_4, window_bounds = array<i64: 64, 64>}, {pipeline_mode = #tpu.pipeline_mode<synchronous>, transform_indices = @transform_5, window_bounds = array<i64: 64, 64>}, {pipeline_mode = #tpu.pipeline_mode<synchronous>, transform_indices = @transform_6, window_bounds = array<i64: 6, 64>}, {pipeline_mode = #tpu.pipeline_mode<synchronous>, transform_indices = @transform_7, window_bounds = array<i64: 64, 8>}, {pipeline_mode = #tpu.pipeline_mode<synchronous>, transform_indices = @transform_8, window_bounds = array<i64: 8, 64>}, {pipeline_mode = #tpu.pipeline_mode<synchronous>, transform_indices = @transform_9, window_bounds = array<i64: 64, 64>}, {transform_indices = @transform_10, window_bounds = array<i64: 2, 64>}]} {
    %c0 = arith.constant 0 : index
    %c0_0 = arith.constant 0 : index
    %0 = vector.load %arg3[%c0, %c0_0] : memref<64x64xf32, #tpu.memory_space<vmem>>, vector<64x64xf32>
    %c0_1 = arith.constant 0 : index
    %c0_2 = arith.constant 0 : index
    %1 = vector.load %arg4[%c0_1, %c0_2] : memref<64x64xf32, #tpu.memory_space<vmem>>, vector<64x64xf32>
    %c0_3 = arith.constant 0 : index
    %c0_4 = arith.constant 0 : index
    %2 = vector.load %arg5[%c0_3, %c0_4] : memref<64x64xf32, #tpu.memory_space<vmem>>, vector<64x64xf32>
    %c0_5 = arith.constant 0 : index
    %c0_6 = arith.constant 0 : index
    %3 = vector.load %arg6[%c0_5, %c0_6] : memref<64x64xf32, #tpu.memory_space<vmem>>, vector<64x64xf32>
    %c0_7 = arith.constant 0 : index
    %c0_8 = arith.constant 0 : index
    %4 = vector.load %arg8[%c0_7, %c0_8] : memref<64x8xf32, #tpu.memory_space<vmem>>, vector<64x8xf32>
    %c0_9 = arith.constant 0 : index
    %c0_10 = arith.constant 0 : index
    %5 = vector.load %arg9[%c0_9, %c0_10] : memref<8x64xf32, #tpu.memory_space<vmem>>, vector<8x64xf32>
    %c0_11 = arith.constant 0 : index
    %c0_12 = arith.constant 0 : index
    %6 = vector.load %arg10[%c0_11, %c0_12] : memref<64x64xf32, #tpu.memory_space<vmem>>, vector<64x64xf32>
    %c0_13 = arith.constant 0 : index
    %c0_14 = arith.constant 0 : index
    %7 = vector.load %arg7[%c0_13, %c0_14] : memref<6x64xf32, #tpu.memory_space<vmem>>, vector<1x64xf32>
    %c1 = arith.constant 1 : index
    %c0_15 = arith.constant 0 : index
    %8 = vector.load %arg7[%c1, %c0_15] : memref<6x64xf32, #tpu.memory_space<vmem>>, vector<1x64xf32>
    %c2 = arith.constant 2 : index
    %c0_16 = arith.constant 0 : index
    %9 = vector.load %arg7[%c2, %c0_16] : memref<6x64xf32, #tpu.memory_space<vmem>>, vector<1x64xf32>
    %c3 = arith.constant 3 : index
    %c0_17 = arith.constant 0 : index
    %10 = vector.load %arg7[%c3, %c0_17] : memref<6x64xf32, #tpu.memory_space<vmem>>, vector<1x64xf32>
    %c4 = arith.constant 4 : index
    %c0_18 = arith.constant 0 : index
    %11 = vector.load %arg7[%c4, %c0_18] : memref<6x64xf32, #tpu.memory_space<vmem>>, vector<1x64xf32>
    %c5 = arith.constant 5 : index
    %c0_19 = arith.constant 0 : index
    %12 = vector.load %arg7[%c5, %c0_19] : memref<6x64xf32, #tpu.memory_space<vmem>>, vector<1x64xf32>
    %c0_20 = arith.constant 0 : index
    %c0_21 = arith.constant 0 : index
    %13 = vector.load %arg1[%c0_20, %c0_21] : memref<48x64xf32, #tpu.memory_space<vmem>>, vector<48x64xf32>
    %c0_22 = arith.constant 0 : index
    %c0_23 = arith.constant 0 : index
    %14 = vector.load %arg2[%c0_22, %c0_23] : memref<2x64xf32, #tpu.memory_space<vmem>>, vector<2x64xf32>
    %cst = arith.constant dense<0.000000e+00> : vector<48x64xf32>
    %15 = tpu.matmul %13, %1, %cst {dimension_numbers = #tpu.dot_dimension_numbers<[1], [0], [0], [1], [0, 0, 1, 1], [], []>} : vector<48x64xf32>, vector<64x64xf32>, vector<48x64xf32> -> vector<48x64xf32>
    %16 = vector.broadcast %8 : vector<1x64xf32> to vector<48x64xf32>
    %17 = arith.addf %15, %16 : vector<48x64xf32>
    %c0_24 = arith.constant 0 : index
    %c0_25 = arith.constant 0 : index
    %18 = vector.load %arg12[%c0_24, %c0_25] : memref<48x64xf32, #tpu.memory_space<vmem>>, vector<48x64xf32>
    tpu.vector_store %arg12[%c0_24, %c0_25], %17 {strides = array<i32>} : memref<48x64xf32, #tpu.memory_space<vmem>>, vector<48x64xf32>,
    %cst_26 = arith.constant dense<0.000000e+00> : vector<48x64xf32>
    %19 = tpu.matmul %13, %2, %cst_26 {dimension_numbers = #tpu.dot_dimension_numbers<[1], [0], [0], [1], [0, 0, 1, 1], [], []>} : vector<48x64xf32>, vector<64x64xf32>, vector<48x64xf32> -> vector<48x64xf32>
    %20 = vector.broadcast %9 : vector<1x64xf32> to vector<48x64xf32>
    %21 = arith.addf %19, %20 : vector<48x64xf32>
    %c0_27 = arith.constant 0 : index
    %c0_28 = arith.constant 0 : index
    %22 = vector.load %arg13[%c0_27, %c0_28] : memref<48x64xf32, #tpu.memory_space<vmem>>, vector<48x64xf32>
    tpu.vector_store %arg13[%c0_27, %c0_28], %21 {strides = array<i32>} : memref<48x64xf32, #tpu.memory_space<vmem>>, vector<48x64xf32>,
    %cst_29 = arith.constant dense<0.000000e+00> : vector<2x64xf32>
    %23 = tpu.matmul %14, %0, %cst_29 {dimension_numbers = #tpu.dot_dimension_numbers<[1], [0], [0], [1], [0, 0, 1, 1], [], []>} : vector<2x64xf32>, vector<64x64xf32>, vector<2x64xf32> -> vector<2x64xf32>
    %24 = vector.broadcast %7 : vector<1x64xf32> to vector<2x64xf32>
    %25 = arith.addf %23, %24 : vector<2x64xf32>
    %c0_30 = arith.constant 0 : index
    %c0_31 = arith.constant 0 : index
    %26 = vector.load %arg14[%c0_30, %c0_31] : memref<2x64xf32, #tpu.memory_space<vmem>>, vector<2x64xf32>
    tpu.vector_store %arg14[%c0_30, %c0_31], %25 {strides = array<i32>} : memref<2x64xf32, #tpu.memory_space<vmem>>, vector<2x64xf32>,
    %27 = tpu.iota {dimensions = array<i32: 0>} : vector<24x1xi32>
    %c17_i32 = arith.constant 17 : i32
    %28 = vector.broadcast %c17_i32 : i32 to vector<24x1xi32>
    %29 = arith.cmpi slt, %27, %28 : vector<24x1xi32>
    %cst_32 = arith.constant 0.000000e+00 : f32
    %cst_33 = arith.constant -1.000000e+30 : f32
    %30 = vector.broadcast %cst_32 : f32 to vector<24x1xf32>
    %31 = vector.broadcast %cst_33 : f32 to vector<24x1xf32>
    %32 = arith.select %29, %30, %31 : vector<24x1xi1>, vector<24x1xf32>
    %c0_34 = arith.constant 0 : index
    %c0_35 = arith.constant 0 : index
    %33 = vector.load %arg12[%c0_34, %c0_35] : memref<48x64xf32, #tpu.memory_space<vmem>>, vector<24x64xf32>
    %c0_36 = arith.constant 0 : index
    %c0_37 = arith.constant 0 : index
    %34 = vector.load %arg13[%c0_36, %c0_37] : memref<48x64xf32, #tpu.memory_space<vmem>>, vector<24x64xf32>
    %c0_38 = arith.constant 0 : index
    %c0_39 = arith.constant 0 : index
    %35 = vector.load %arg14[%c0_38, %c0_39] : memref<2x64xf32, #tpu.memory_space<vmem>>, vector<1x64xf32>
    %36 = vector.broadcast %35 : vector<1x64xf32> to vector<24x64xf32>
    %37 = arith.mulf %36, %33 : vector<24x64xf32>
    %cst_40 = arith.constant dense<0.000000e+00> : vector<24x8xf32>
    %38 = tpu.matmul %37, %4, %cst_40 {dimension_numbers = #tpu.dot_dimension_numbers<[1], [0], [0], [1], [0, 0, 1, 1], [], []>} : vector<24x64xf32>, vector<64x8xf32>, vector<24x8xf32> -> vector<24x8xf32>
    %39 = vector.broadcast %32 : vector<24x1xf32> to vector<24x8xf32>
    %40 = arith.addf %38, %39 : vector<24x8xf32>
    %cst_41 = arith.constant dense<0xFF800000> : vector<8xf32>
    %41 = vector.multi_reduction <maximumf>, %40, %cst_41 [0] : vector<24x8xf32> to vector<8xf32>
    %42 = vector.shape_cast %41 : vector<8xf32> to vector<1x8xf32>
    %43 = vector.broadcast %42 : vector<1x8xf32> to vector<24x8xf32>
    %44 = arith.subf %40, %43 : vector<24x8xf32>
    %45 = math.exp %44 : vector<24x8xf32>
    %cst_42 = arith.constant dense<0.000000e+00> : vector<8xf32>
    %46 = vector.multi_reduction <add>, %45, %cst_42 [0] : vector<24x8xf32> to vector<8xf32>
    %47 = vector.shape_cast %46 : vector<8xf32> to vector<1x8xf32>
    %48 = tpu.reciprocal %47 {approx = true} : vector<1x8xf32> -> vector<1x8xf32>
    %49 = vector.broadcast %48 : vector<1x8xf32> to vector<24x8xf32>
    %50 = arith.mulf %45, %49 : vector<24x8xf32>
    %cst_43 = arith.constant dense<0.000000e+00> : vector<24x64xf32>
    %51 = tpu.matmul %50, %5, %cst_43 {dimension_numbers = #tpu.dot_dimension_numbers<[1], [0], [0], [1], [0, 0, 1, 1], [], []>} : vector<24x8xf32>, vector<8x64xf32>, vector<24x64xf32> -> vector<24x64xf32>
    %52 = arith.mulf %51, %34 : vector<24x64xf32>
    %cst_44 = arith.constant dense<0.000000e+00> : vector<64xf32>
    %53 = vector.multi_reduction <add>, %52, %cst_44 [0] : vector<24x64xf32> to vector<64xf32>
    %54 = vector.shape_cast %53 : vector<64xf32> to vector<1x64xf32>
    %c0_45 = arith.constant 0 : index
    %c0_46 = arith.constant 0 : index
    %55 = vector.load %arg15[%c0_45, %c0_46] : memref<2x64xf32, #tpu.memory_space<vmem>>, vector<1x64xf32>
    tpu.vector_store %arg15[%c0_45, %c0_46], %54 {strides = array<i32>} : memref<2x64xf32, #tpu.memory_space<vmem>>, vector<1x64xf32>,
    %c24 = arith.constant 24 : index
    %c0_47 = arith.constant 0 : index
    %56 = vector.load %arg12[%c24, %c0_47] : memref<48x64xf32, #tpu.memory_space<vmem>>, vector<24x64xf32>
    %c24_48 = arith.constant 24 : index
    %c0_49 = arith.constant 0 : index
    %57 = vector.load %arg13[%c24_48, %c0_49] : memref<48x64xf32, #tpu.memory_space<vmem>>, vector<24x64xf32>
    %c1_50 = arith.constant 1 : index
    %c0_51 = arith.constant 0 : index
    %58 = vector.load %arg14[%c1_50, %c0_51] : memref<2x64xf32, #tpu.memory_space<vmem>>, vector<1x64xf32>
    %59 = vector.broadcast %58 : vector<1x64xf32> to vector<24x64xf32>
    %60 = arith.mulf %59, %56 : vector<24x64xf32>
    %cst_52 = arith.constant dense<0.000000e+00> : vector<24x8xf32>
    %61 = tpu.matmul %60, %4, %cst_52 {dimension_numbers = #tpu.dot_dimension_numbers<[1], [0], [0], [1], [0, 0, 1, 1], [], []>} : vector<24x64xf32>, vector<64x8xf32>, vector<24x8xf32> -> vector<24x8xf32>
    %62 = vector.broadcast %32 : vector<24x1xf32> to vector<24x8xf32>
    %63 = arith.addf %61, %62 : vector<24x8xf32>
    %cst_53 = arith.constant dense<0xFF800000> : vector<8xf32>
    %64 = vector.multi_reduction <maximumf>, %63, %cst_53 [0] : vector<24x8xf32> to vector<8xf32>
    %65 = vector.shape_cast %64 : vector<8xf32> to vector<1x8xf32>
    %66 = vector.broadcast %65 : vector<1x8xf32> to vector<24x8xf32>
    %67 = arith.subf %63, %66 : vector<24x8xf32>
    %68 = math.exp %67 : vector<24x8xf32>
    %cst_54 = arith.constant dense<0.000000e+00> : vector<8xf32>
    %69 = vector.multi_reduction <add>, %68, %cst_54 [0] : vector<24x8xf32> to vector<8xf32>
    %70 = vector.shape_cast %69 : vector<8xf32> to vector<1x8xf32>
    %71 = tpu.reciprocal %70 {approx = true} : vector<1x8xf32> -> vector<1x8xf32>
    %72 = vector.broadcast %71 : vector<1x8xf32> to vector<24x8xf32>
    %73 = arith.mulf %68, %72 : vector<24x8xf32>
    %cst_55 = arith.constant dense<0.000000e+00> : vector<24x64xf32>
    %74 = tpu.matmul %73, %5, %cst_55 {dimension_numbers = #tpu.dot_dimension_numbers<[1], [0], [0], [1], [0, 0, 1, 1], [], []>} : vector<24x8xf32>, vector<8x64xf32>, vector<24x64xf32> -> vector<24x64xf32>
    %75 = arith.mulf %74, %57 : vector<24x64xf32>
    %cst_56 = arith.constant dense<0.000000e+00> : vector<64xf32>
    %76 = vector.multi_reduction <add>, %75, %cst_56 [0] : vector<24x64xf32> to vector<64xf32>
    %77 = vector.shape_cast %76 : vector<64xf32> to vector<1x64xf32>
    %c1_57 = arith.constant 1 : index
    %c0_58 = arith.constant 0 : index
    %78 = vector.load %arg15[%c1_57, %c0_58] : memref<2x64xf32, #tpu.memory_space<vmem>>, vector<1x64xf32>
    tpu.vector_store %arg15[%c1_57, %c0_58], %77 {strides = array<i32>} : memref<2x64xf32, #tpu.memory_space<vmem>>, vector<1x64xf32>,
    %c0_59 = arith.constant 0 : index
    %c0_60 = arith.constant 0 : index
    %79 = vector.load %arg15[%c0_59, %c0_60] : memref<2x64xf32, #tpu.memory_space<vmem>>, vector<2x64xf32>
    %cst_61 = arith.constant dense<0.000000e+00> : vector<2x64xf32>
    %80 = tpu.matmul %79, %3, %cst_61 {dimension_numbers = #tpu.dot_dimension_numbers<[1], [0], [0], [1], [0, 0, 1, 1], [], []>} : vector<2x64xf32>, vector<64x64xf32>, vector<2x64xf32> -> vector<2x64xf32>
    %81 = vector.broadcast %10 : vector<1x64xf32> to vector<2x64xf32>
    %82 = arith.addf %80, %81 : vector<2x64xf32>
    %83 = arith.addf %14, %82 : vector<2x64xf32>
    %cst_62 = arith.constant dense<0.000000e+00> : vector<2x64xf32>
    %84 = tpu.matmul %83, %6, %cst_62 {dimension_numbers = #tpu.dot_dimension_numbers<[1], [0], [0], [1], [0, 0, 1, 1], [], []>} : vector<2x64xf32>, vector<64x64xf32>, vector<2x64xf32> -> vector<2x64xf32>
    %85 = arith.subf %83, %84 : vector<2x64xf32>
    %86 = arith.mulf %85, %85 : vector<2x64xf32>
    %cst_63 = arith.constant dense<0.000000e+00> : vector<2x64xf32>
    %87 = tpu.matmul %86, %6, %cst_63 {dimension_numbers = #tpu.dot_dimension_numbers<[1], [0], [0], [1], [0, 0, 1, 1], [], []>} : vector<2x64xf32>, vector<64x64xf32>, vector<2x64xf32> -> vector<2x64xf32>
    %cst_64 = arith.constant 9.99999974E-6 : f32
    %88 = vector.broadcast %cst_64 : f32 to vector<2x64xf32>
    %89 = arith.addf %87, %88 : vector<2x64xf32>
    %90 = math.rsqrt %89 : vector<2x64xf32>
    %91 = arith.mulf %85, %90 : vector<2x64xf32>
    %92 = vector.broadcast %11 : vector<1x64xf32> to vector<2x64xf32>
    %93 = arith.mulf %91, %92 : vector<2x64xf32>
    %94 = vector.broadcast %12 : vector<1x64xf32> to vector<2x64xf32>
    %95 = arith.addf %93, %94 : vector<2x64xf32>
    %c0_65 = arith.constant 0 : index
    %c0_66 = arith.constant 0 : index
    %96 = vector.load %arg11[%c0_65, %c0_66] : memref<2x64xf32, #tpu.memory_space<vmem>>, vector<2x64xf32>
    tpu.vector_store %arg11[%c0_65, %c0_66], %95 {strides = array<i32>} : memref<2x64xf32, #tpu.memory_space<vmem>>, vector<2x64xf32>,
    return
  }
  func.func @transform_0(%arg0: i32) -> (i32, i32) {
    %c0_i32 = arith.constant 0 : i32
    %c0_i32_0 = arith.constant 0 : i32
    return %arg0, %c0_i32 : i32, i32
  }
  func.func @transform_1(%arg0: i32) -> (i32, i32) {
    %c0_i32 = arith.constant 0 : i32
    %c0_i32_0 = arith.constant 0 : i32
    return %arg0, %c0_i32 : i32, i32
  }
  func.func @transform_2(%arg0: i32) -> (i32, i32) {
    %c0_i32 = arith.constant 0 : i32
    %c0_i32_0 = arith.constant 0 : i32
    %c0_i32_1 = arith.constant 0 : i32
    return %c0_i32, %c0_i32_0 : i32, i32
  }
  func.func @transform_3(%arg0: i32) -> (i32, i32) {
    %c0_i32 = arith.constant 0 : i32
    %c0_i32_0 = arith.constant 0 : i32
    %c0_i32_1 = arith.constant 0 : i32
    return %c0_i32, %c0_i32_0 : i32, i32
  }
  func.func @transform_4(%arg0: i32) -> (i32, i32) {
    %c0_i32 = arith.constant 0 : i32
    %c0_i32_0 = arith.constant 0 : i32
    %c0_i32_1 = arith.constant 0 : i32
    return %c0_i32, %c0_i32_0 : i32, i32
  }
  func.func @transform_5(%arg0: i32) -> (i32, i32) {
    %c0_i32 = arith.constant 0 : i32
    %c0_i32_0 = arith.constant 0 : i32
    %c0_i32_1 = arith.constant 0 : i32
    return %c0_i32, %c0_i32_0 : i32, i32
  }
  func.func @transform_6(%arg0: i32) -> (i32, i32) {
    %c0_i32 = arith.constant 0 : i32
    %c0_i32_0 = arith.constant 0 : i32
    %c0_i32_1 = arith.constant 0 : i32
    return %c0_i32, %c0_i32_0 : i32, i32
  }
  func.func @transform_7(%arg0: i32) -> (i32, i32) {
    %c0_i32 = arith.constant 0 : i32
    %c0_i32_0 = arith.constant 0 : i32
    %c0_i32_1 = arith.constant 0 : i32
    return %c0_i32, %c0_i32_0 : i32, i32
  }
  func.func @transform_8(%arg0: i32) -> (i32, i32) {
    %c0_i32 = arith.constant 0 : i32
    %c0_i32_0 = arith.constant 0 : i32
    %c0_i32_1 = arith.constant 0 : i32
    return %c0_i32, %c0_i32_0 : i32, i32
  }
  func.func @transform_9(%arg0: i32) -> (i32, i32) {
    %c0_i32 = arith.constant 0 : i32
    %c0_i32_0 = arith.constant 0 : i32
    %c0_i32_1 = arith.constant 0 : i32
    return %c0_i32, %c0_i32_0 : i32, i32
  }
  func.func @transform_10(%arg0: i32) -> (i32, i32) {
    %c0_i32 = arith.constant 0 : i32
    %c0_i32_0 = arith.constant 0 : i32
    return %arg0, %c0_i32 : i32, i32
  }
}

</mosaic_0001>

<llo_original>
// kernel: multi_head_map_attention_v2.1
$region0: #{multi_head_map_attention_v2.1}
  #allocation0 [shape = 'u32[]', space=smem, size = 0x4, offset = 0x4, fixed_abs, tag = 'smem constant byte address 0x4 - core index']
  #allocation1 [shape = 'u32[144,128]{1,0:T(1,128)}', space=vmem, size = 0x12000, scoped, tag = 'internal scratch']
  #allocation2 [shape = 'f32[48,64]{1,0:T(8,128)}', space=vmem, size = 0x6000, scoped, tag = 'scratch operand']
  #allocation3 [shape = 'f32[48,64]{1,0:T(8,128)}', space=vmem, size = 0x6000, scoped, tag = 'scratch operand']
  #allocation4 [shape = 'f32[2,64]{1,0:T(2,128)}', space=vmem, size = 0x400, scoped, tag = 'scratch operand']
  #allocation5 [shape = 'f32[2,64]{1,0:T(2,128)}', space=vmem, size = 0x400, scoped, tag = 'scratch operand']
  %s0 = inlined_call_operand.vmem [shape: f32[48,64], index: 0, kind: input, shape index: {}]
  %s1 = inlined_call_operand.vmem [shape: f32[2,64], index: 1, kind: input, shape index: {}]
  %s2 = inlined_call_operand.vmem [shape: f32[64,64], index: 2, kind: input, shape index: {}]
  %s3 = inlined_call_operand.vmem [shape: f32[64,64], index: 3, kind: input, shape index: {}]
  %s4 = inlined_call_operand.vmem [shape: f32[64,64], index: 4, kind: input, shape index: {}]
  %s5 = inlined_call_operand.vmem [shape: f32[64,64], index: 5, kind: input, shape index: {}]
  %s6 = inlined_call_operand.vmem [shape: f32[6,64], index: 6, kind: input, shape index: {}]
  %s7 = inlined_call_operand.vmem [shape: f32[64,8], index: 7, kind: input, shape index: {}]
  %s8 = inlined_call_operand.vmem [shape: f32[8,64], index: 8, kind: input, shape index: {}]
  %s9 = inlined_call_operand.vmem [shape: f32[64,64], index: 9, kind: input, shape index: {}]
  %s10 = inlined_call_operand.hbm [shape: f32[2,64], index: 10, kind: output, shape index: {}]
  %s11 = sld [smem:[#allocation0]]
  $region50: #{multi_head_map_attention_v2.1} parent=0
    _
  %s13 = ssub.s32 1, %s11
  %s14 = scalar_select 0, %s13, %s11
  $region1: #{multi_head_map_attention_v2.1} parent=0
    #allocation6 [shape = 'u8[1024]{0}', space=vmem, size = 0x400, scoped, tag = 'output window, operand 0, single buffered']
    #allocation7 [shape = 's32[1]{0}', space=sflag, size = 0x4, scoped, tag = 'scoped memory for multi_head_map_attention_v2.1']
    %15 = vsyncpa [#allocation7], 0
    // Predicated region
    $region2: #{multi_head_map_attention_v2.1} parent=1 // pred_check
      _
    $region3: #{multi_head_map_attention_v2.1} parent=1 // pred_check_branch
      %17 = sbr.rel (0) target = $region5
    $region4: #{multi_head_map_attention_v2.1} parent=1 // pred_region
      _
    $region5: #{multi_head_map_attention_v2.1} parent=1 // pred_fallthru
      _
    // Predicated region
    $region6: #{multi_head_map_attention_v2.1} parent=1 // pred_check
      _
    $region7: #{multi_head_map_attention_v2.1} parent=1 // pred_check_branch
      %19 = sbr.rel (0) target = $region9
    $region8: #{multi_head_map_attention_v2.1} parent=1 // pred_region
      _
    $region9: #{multi_head_map_attention_v2.1} parent=1 // pred_fallthru
      _
    // Predicated region
    $region10: #{multi_head_map_attention_v2.1} parent=1 // pred_check
      _
    $region11: #{multi_head_map_attention_v2.1} parent=1 // pred_check_branch
      %21 = sbr.rel (0) target = $region13
    $region12: #{multi_head_map_attention_v2.1} parent=1 // pred_region
      _
    $region13: #{multi_head_map_attention_v2.1} parent=1 // pred_fallthru
      _
    // Predicated region
    $region14: #{multi_head_map_attention_v2.1} parent=1 // pred_check
      _
    $region15: #{multi_head_map_attention_v2.1} parent=1 // pred_check_branch
      %23 = sbr.rel (0) target = $region17
    $region16: #{multi_head_map_attention_v2.1} parent=1 // pred_region
      _
    $region17: #{multi_head_map_attention_v2.1} parent=1 // pred_fallthru
      _
    // Predicated region
    $region18: #{multi_head_map_attention_v2.1} parent=1 // pred_check
      _
    $region19: #{multi_head_map_attention_v2.1} parent=1 // pred_check_branch
      %25 = sbr.rel (0) target = $region21
    $region20: #{multi_head_map_attention_v2.1} parent=1 // pred_region
      _
    $region21: #{multi_head_map_attention_v2.1} parent=1 // pred_fallthru
      _
    // Predicated region
    $region22: #{multi_head_map_attention_v2.1} parent=1 // pred_check
      _
    $region23: #{multi_head_map_attention_v2.1} parent=1 // pred_check_branch
      %27 = sbr.rel (0) target = $region25
    $region24: #{multi_head_map_attention_v2.1} parent=1 // pred_region
      _
    $region25: #{multi_head_map_attention_v2.1} parent=1 // pred_fallthru
      _
    // Predicated region
    $region26: #{multi_head_map_attention_v2.1} parent=1 // pred_check
      _
    $region27: #{multi_head_map_attention_v2.1} parent=1 // pred_check_branch
      %29 = sbr.rel (0) target = $region29
    $region28: #{multi_head_map_attention_v2.1} parent=1 // pred_region
      _
    $region29: #{multi_head_map_attention_v2.1} parent=1 // pred_fallthru
      _
    // Predicated region
    $region30: #{multi_head_map_attention_v2.1} parent=1 // pred_check
      _
    $region31: #{multi_head_map_attention_v2.1} parent=1 // pred_check_branch
      %31 = sbr.rel (0) target = $region33
    $region32: #{multi_head_map_attention_v2.1} parent=1 // pred_region
      _
    $region33: #{multi_head_map_attention_v2.1} parent=1 // pred_fallthru
      _
    // Predicated region
    $region34: #{multi_head_map_attention_v2.1} parent=1 // pred_check
      _
    $region35: #{multi_head_map_attention_v2.1} parent=1 // pred_check_branch
      %33 = sbr.rel (0) target = $region37
    $region36: #{multi_head_map_attention_v2.1} parent=1 // pred_region
      _
    $region37: #{multi_head_map_attention_v2.1} parent=1 // pred_fallthru
      _
    // Predicated region
    $region38: #{multi_head_map_attention_v2.1} parent=1 // pred_check
      _
    $region39: #{multi_head_map_attention_v2.1} parent=1 // pred_check_branch
      %35 = sbr.rel (0) target = $region41
    $region40: #{multi_head_map_attention_v2.1} parent=1 // pred_region
      _
    $region41: #{multi_head_map_attention_v2.1} parent=1 // pred_fallthru
      _
    %v36 = vld [vmem:[%s2] sm:$0xff]
    %v37 = vld [vmem:[%s2 + $0x8] sm:$0xff]
    %v38 = vld [vmem:[%s2 + $0x10] sm:$0xff]
    %v39 = vld [vmem:[%s2 + $0x18] sm:$0xff]
    %v40 = vld [vmem:[%s2 + $0x20] sm:$0xff]
    %v41 = vld [vmem:[%s2 + $0x28] sm:$0xff]
    %v42 = vld [vmem:[%s2 + $0x30] sm:$0xff]
    %v43 = vld [vmem:[%s2 + $0x38] sm:$0xff]
    %v44 = vld [vmem:[%s3] sm:$0xff]
    %v45 = vld [vmem:[%s3 + $0x8] sm:$0xff]
    %v46 = vld [vmem:[%s3 + $0x10] sm:$0xff]
    %v47 = vld [vmem:[%s3 + $0x18] sm:$0xff]
    %v48 = vld [vmem:[%s3 + $0x20] sm:$0xff]
    %v49 = vld [vmem:[%s3 + $0x28] sm:$0xff]
    %v50 = vld [vmem:[%s3 + $0x30] sm:$0xff]
    %v51 = vld [vmem:[%s3 + $0x38] sm:$0xff]
    %v52 = vld [vmem:[%s4] sm:$0xff]
    %v53 = vld [vmem:[%s4 + $0x8] sm:$0xff]
    %v54 = vld [vmem:[%s4 + $0x10] sm:$0xff]
    %v55 = vld [vmem:[%s4 + $0x18] sm:$0xff]
    %v56 = vld [vmem:[%s4 + $0x20] sm:$0xff]
    %v57 = vld [vmem:[%s4 + $0x28] sm:$0xff]
    %v58 = vld [vmem:[%s4 + $0x30] sm:$0xff]
    %v59 = vld [vmem:[%s4 + $0x38] sm:$0xff]
    %v60 = vld [vmem:[%s5] sm:$0xff]
    %v61 = vld [vmem:[%s5 + $0x8] sm:$0xff]
    %v62 = vld [vmem:[%s5 + $0x10] sm:$0xff]
    %v63 = vld [vmem:[%s5 + $0x18] sm:$0xff]
    %v64 = vld [vmem:[%s5 + $0x20] sm:$0xff]
    %v65 = vld [vmem:[%s5 + $0x28] sm:$0xff]
    %v66 = vld [vmem:[%s5 + $0x30] sm:$0xff]
    %v67 = vld [vmem:[%s5 + $0x38] sm:$0xff]
    %v68 = vld [vmem:[%s7] sm:$0xff]
    %v69 = vld [vmem:[%s7 + $0x8] sm:$0xff]
    %v70 = vld [vmem:[%s7 + $0x10] sm:$0xff]
    %v71 = vld [vmem:[%s7 + $0x18] sm:$0xff]
    %v72 = vld [vmem:[%s7 + $0x20] sm:$0xff]
    %v73 = vld [vmem:[%s7 + $0x28] sm:$0xff]
    %v74 = vld [vmem:[%s7 + $0x30] sm:$0xff]
    %v75 = vld [vmem:[%s7 + $0x38] sm:$0xff]
    %v76 = vld [vmem:[%s8] sm:$0xff]
    %v77 = vld [vmem:[%s9] sm:$0xff]
    %v78 = vld [vmem:[%s9 + $0x8] sm:$0xff]
    %v79 = vld [vmem:[%s9 + $0x10] sm:$0xff]
    %v80 = vld [vmem:[%s9 + $0x18] sm:$0xff]
    %v81 = vld [vmem:[%s9 + $0x20] sm:$0xff]
    %v82 = vld [vmem:[%s9 + $0x28] sm:$0xff]
    %v83 = vld [vmem:[%s9 + $0x30] sm:$0xff]
    %v84 = vld [vmem:[%s9 + $0x38] sm:$0xff]
    %v85 = vld [vmem:[%s6] sm:$0x1]
    %v86 = vld [vmem:[%s6 + $0x1] sm:$0x1]
    %v87 = vld [vmem:[%s6 + $0x2] sm:$0x1]
    %v88 = vld [vmem:[%s6 + $0x3] sm:$0x1]
    %v89 = vld [vmem:[%s6 + $0x4] sm:$0x1]
    %v90 = vld [vmem:[%s6 + $0x5] sm:$0x1]
    %v91 = vld [vmem:[%s0] sm:$0xff]
    %v92 = vld [vmem:[%s0 + $0x8] sm:$0xff]
    %v93 = vld [vmem:[%s0 + $0x10] sm:$0xff]
    %v94 = vld [vmem:[%s0 + $0x18] sm:$0xff]
    %v95 = vld [vmem:[%s0 + $0x20] sm:$0xff]
    %v96 = vld [vmem:[%s0 + $0x28] sm:$0xff]
    %v97 = vld [vmem:[%s1] sm:$0x3]
    %v98 = vlaneseq
    %v99 = vshrl.u32 %v98, 7
    %v100 = vsub.s32 0, %v99
    %v101 = vrot.slane %v86, %v100
    %vm102 = vcmask 523264
    %v104 = vsel %vm102, %v91, 0
    %v107 = vsel %vm102, %v92, 0
    %v110 = vsel %vm102, %v93, 0
    %v113 = vsel %vm102, %v94, 0
    %v116 = vsel %vm102, %v95, 0
    %v119 = vsel %vm102, %v96, 0
    %121 = vmatprep.subr.mxu0 0.0
    %122 = vmatpush1.msra.mxu0 0.0
    %123 = vmatprep.subr.mxu0 0.0
    %124 = vmatpush1.msra.mxu0 0.0
    %125 = vmatprep.subr.mxu0 0.0
    %126 = vmatpush1.msra.mxu0 0.0
    %127 = vmatprep.subr.mxu0 0.0
    %128 = vmatpush1.msra.mxu0 0.0
    %129 = vmatprep.subr.mxu0 0.0
    %130 = vmatpush1.msra.mxu0 0.0
    %131 = vmatprep.subr.mxu0 0.0
    %132 = vmatpush1.msra.mxu0 0.0
    %133 = vmatprep.subr.mxu0 0.0
    %134 = vmatpush1.msra.mxu0 0.0
    %135 = vmatprep.subr.mxu0 0.0
    %136 = vmatpush1.msra.mxu0 0.0
    %137 = vmatprep.subr.mxu0 0.0
    %138 = vmatpush1.msra.mxu0 %v51
    %139 = vmatprep.subr.mxu0 0.0
    %140 = vmatpush1.msra.mxu0 %v50
    %141 = vmatprep.subr.mxu0 0.0
    %142 = vmatpush1.msra.mxu0 %v49
    %143 = vmatprep.subr.mxu0 0.0
    %144 = vmatpush1.msra.mxu0 %v48
    %145 = vmatprep.subr.mxu0 0.0
    %146 = vmatpush1.msra.mxu0 %v47
    %147 = vmatprep.subr.mxu0 0.0
    %148 = vmatpush1.msra.mxu0 %v46
    %149 = vmatprep.subr.mxu0 0.0
    %150 = vmatpush1.msra.mxu0 %v45
    %151 = vmatprep.subr.mxu0 0.0
    %152 = vmatpush1.msra.mxu0 %v44
    %153 = vmatprep.subr.mxu0 0.0
    %154 = vmatpush2.msra.mxu0 0.0
    %155 = vmatprep.subr.mxu0 0.0
    %156 = vmatpush2.msra.mxu0 0.0
    %157 = vmatprep.subr.mxu0 0.0
    %158 = vmatpush2.msra.mxu0 0.0
    %159 = vmatprep.subr.mxu0 0.0
    %160 = vmatpush2.msra.mxu0 0.0
    %161 = vmatprep.subr.mxu0 0.0
    %162 = vmatpush2.msra.mxu0 0.0
    %163 = vmatprep.subr.mxu0 0.0
    %164 = vmatpush2.msra.mxu0 0.0
    %165 = vmatprep.subr.mxu0 0.0
    %166 = vmatpush2.msra.mxu0 0.0
    %167 = vmatprep.subr.mxu0 0.0
    %168 = vmatpush2.msra.mxu0 0.0
    %169 = vmatprep.subr.mxu0 0.0
    %170 = vmatpush2.msra.mxu0 0.0
    %171 = vmatprep.subr.mxu0 0.0
    %172 = vmatpush2.msra.mxu0 0.0
    %173 = vmatprep.subr.mxu0 0.0
    %174 = vmatpush2.msra.mxu0 0.0
    %175 = vmatprep.subr.mxu0 0.0
    %176 = vmatpush2.msra.mxu0 0.0
    %177 = vmatprep.subr.mxu0 0.0
    %178 = vmatpush2.msra.mxu0 0.0
    %179 = vmatprep.subr.mxu0 0.0
    %180 = vmatpush2.msra.mxu0 0.0
    %181 = vmatprep.subr.mxu0 0.0
    %182 = vmatpush2.msra.mxu0 0.0
    %183 = vmatprep.subr.mxu0 0.0
    %184 = vmatpush2.msra.mxu0 0.0
    %185 = vmatprep.mubr.f32.mxu0 0.0
    %186 = vmatmul.mubr.f32.gmra.mxu0 %v104
    %v187 = vpop.f32.mrf.mxu0
    %v188 = vadd.f32 %v101, %v187
    %v189 = vpop.f32.mrf.mxu0
    %190 = vmatprep.mubr.f32.mxu0 0.0
    %191 = vmatmul.mubr.f32.gmra.mxu0 %v107
    %v192 = vpop.f32.mrf.mxu0
    %v193 = vadd.f32 %v101, %v192
    %v194 = vpop.f32.mrf.mxu0
    %195 = vmatprep.mubr.f32.mxu0 0.0
    %196 = vmatmul.mubr.f32.gmra.mxu0 %v110
    %v197 = vpop.f32.mrf.mxu0
    %v198 = vadd.f32 %v101, %v197
    %v199 = vpop.f32.mrf.mxu0
    %200 = vmatprep.mubr.f32.mxu0 0.0
    %201 = vmatmul.mubr.f32.gmra.mxu0 %v113
    %v202 = vpop.f32.mrf.mxu0
    %v203 = vadd.f32 %v101, %v202
    %v204 = vpop.f32.mrf.mxu0
    %205 = vmatprep.mubr.f32.mxu0 0.0
    %206 = vmatmul.mubr.f32.gmra.mxu0 %v116
    %v207 = vpop.f32.mrf.mxu0
    %v208 = vadd.f32 %v101, %v207
    %v209 = vpop.f32.mrf.mxu0
    %210 = vmatprep.mubr.f32.mxu0 0.0
    %211 = vmatmul.mubr.f32.gmra.mxu0 %v119
    %v212 = vpop.f32.mrf.mxu0
    %v213 = vadd.f32 %v101, %v212
    %v214 = vpop.f32.mrf.mxu0
    %215 = vdwg.mxu0
    %216 = vst.msk [vmem:[#allocation2] sm:$0xff] %vm102, %v188
    %217 = vst.msk [vmem:[#allocation2 + $0x8] sm:$0xff] %vm102, %v193
    %218 = vst.msk [vmem:[#allocation2 + $0x10] sm:$0xff] %vm102, %v198
    %219 = vst.msk [vmem:[#allocation2 + $0x18] sm:$0xff] %vm102, %v203
    %220 = vst.msk [vmem:[#allocation2 + $0x20] sm:$0xff] %vm102, %v208
    %221 = vst.msk [vmem:[#allocation2 + $0x28] sm:$0xff] %vm102, %v213
    %v222 = vlaneseq
    %v223 = vshrl.u32 %v222, 7
    %v224 = vsub.s32 0, %v223
    %v225 = vrot.slane %v87, %v224
    %226 = vmatprep.subr.mxu0 0.0
    %227 = vmatpush1.msra.mxu0 0.0
    %228 = vmatprep.subr.mxu0 0.0
    %229 = vmatpush1.msra.mxu0 0.0
    %230 = vmatprep.subr.mxu0 0.0
    %231 = vmatpush1.msra.mxu0 0.0
    %232 = vmatprep.subr.mxu0 0.0
    %233 = vmatpush1.msra.mxu0 0.0
    %234 = vmatprep.subr.mxu0 0.0
    %235 = vmatpush1.msra.mxu0 0.0
    %236 = vmatprep.subr.mxu0 0.0
    %237 = vmatpush1.msra.mxu0 0.0
    %238 = vmatprep.subr.mxu0 0.0
    %239 = vmatpush1.msra.mxu0 0.0
    %240 = vmatprep.subr.mxu0 0.0
    %241 = vmatpush1.msra.mxu0 0.0
    %242 = vmatprep.subr.mxu0 0.0
    %243 = vmatpush1.msra.mxu0 %v59
    %244 = vmatprep.subr.mxu0 0.0
    %245 = vmatpush1.msra.mxu0 %v58
    %246 = vmatprep.subr.mxu0 0.0
    %247 = vmatpush1.msra.mxu0 %v57
    %248 = vmatprep.subr.mxu0 0.0
    %249 = vmatpush1.msra.mxu0 %v56
    %250 = vmatprep.subr.mxu0 0.0
    %251 = vmatpush1.msra.mxu0 %v55
    %252 = vmatprep.subr.mxu0 0.0
    %253 = vmatpush1.msra.mxu0 %v54
    %254 = vmatprep.subr.mxu0 0.0
    %255 = vmatpush1.msra.mxu0 %v53
    %256 = vmatprep.subr.mxu0 0.0
    %257 = vmatpush1.msra.mxu0 %v52
    %258 = vmatprep.subr.mxu0 0.0
    %259 = vmatpush2.msra.mxu0 0.0
    %260 = vmatprep.subr.mxu0 0.0
    %261 = vmatpush2.msra.mxu0 0.0
    %262 = vmatprep.subr.mxu0 0.0
    %263 = vmatpush2.msra.mxu0 0.0
    %264 = vmatprep.subr.mxu0 0.0
    %265 = vmatpush2.msra.mxu0 0.0
    %266 = vmatprep.subr.mxu0 0.0
    %267 = vmatpush2.msra.mxu0 0.0
    %268 = vmatprep.subr.mxu0 0.0
    %269 = vmatpush2.msra.mxu0 0.0
    %270 = vmatprep.subr.mxu0 0.0
    %271 = vmatpush2.msra.mxu0 0.0
    %272 = vmatprep.subr.mxu0 0.0
    %273 = vmatpush2.msra.mxu0 0.0
    %274 = vmatprep.subr.mxu0 0.0
    %275 = vmatpush2.msra.mxu0 0.0
    %276 = vmatprep.subr.mxu0 0.0
    %277 = vmatpush2.msra.mxu0 0.0
    %278 = vmatprep.subr.mxu0 0.0
    %279 = vmatpush2.msra.mxu0 0.0
    %280 = vmatprep.subr.mxu0 0.0
    %281 = vmatpush2.msra.mxu0 0.0
    %282 = vmatprep.subr.mxu0 0.0
    %283 = vmatpush2.msra.mxu0 0.0
    %284 = vmatprep.subr.mxu0 0.0
    %285 = vmatpush2.msra.mxu0 0.0
    %286 = vmatprep.subr.mxu0 0.0
    %287 = vmatpush2.msra.mxu0 0.0
    %288 = vmatprep.subr.mxu0 0.0
    %289 = vmatpush2.msra.mxu0 0.0
    %290 = vmatprep.mubr.f32.mxu0 0.0
    %291 = vmatmul.mubr.f32.gmra.mxu0 %v104
    %v292 = vpop.f32.mrf.mxu0
    %v293 = vadd.f32 %v225, %v292
    %v294 = vpop.f32.mrf.mxu0
    %295 = vmatprep.mubr.f32.mxu0 0.0
    %296 = vmatmul.mubr.f32.gmra.mxu0 %v107
    %v297 = vpop.f32.mrf.mxu0
    %v298 = vadd.f32 %v225, %v297
    %v299 = vpop.f32.mrf.mxu0
    %300 = vmatprep.mubr.f32.mxu0 0.0
    %301 = vmatmul.mubr.f32.gmra.mxu0 %v110
    %v302 = vpop.f32.mrf.mxu0
    %v303 = vadd.f32 %v225, %v302
    %v304 = vpop.f32.mrf.mxu0
    %305 = vmatprep.mubr.f32.mxu0 0.0
    %306 = vmatmul.mubr.f32.gmra.mxu0 %v113
    %v307 = vpop.f32.mrf.mxu0
    %v308 = vadd.f32 %v225, %v307
    %v309 = vpop.f32.mrf.mxu0
    %310 = vmatprep.mubr.f32.mxu0 0.0
    %311 = vmatmul.mubr.f32.gmra.mxu0 %v116
    %v312 = vpop.f32.mrf.mxu0
    %v313 = vadd.f32 %v225, %v312
    %v314 = vpop.f32.mrf.mxu0
    %315 = vmatprep.mubr.f32.mxu0 0.0
    %316 = vmatmul.mubr.f32.gmra.mxu0 %v119
    %v317 = vpop.f32.mrf.mxu0
    %v318 = vadd.f32 %v225, %v317
    %v319 = vpop.f32.mrf.mxu0
    %320 = vdwg.mxu0
    %321 = vst.msk [vmem:[#allocation3] sm:$0xff] %vm102, %v293
    %322 = vst.msk [vmem:[#allocation3 + $0x8] sm:$0xff] %vm102, %v298
    %323 = vst.msk [vmem:[#allocation3 + $0x10] sm:$0xff] %vm102, %v303
    %324 = vst.msk [vmem:[#allocation3 + $0x18] sm:$0xff] %vm102, %v308
    %325 = vst.msk [vmem:[#allocation3 + $0x20] sm:$0xff] %vm102, %v313
    %326 = vst.msk [vmem:[#allocation3 + $0x28] sm:$0xff] %vm102, %v318
    %v327 = vlaneseq
    %v328 = vshrl.u32 %v327, 7
    %v329 = vsub.s32 0, %v328
    %v330 = vrot.slane %v85, %v329
    %v332 = vsel %vm102, %v97, 0
    %334 = vmatprep.subr.mxu0 0.0
    %335 = vmatpush1.msra.mxu0 0.0
    %336 = vmatprep.subr.mxu0 0.0
    %337 = vmatpush1.msra.mxu0 0.0
    %338 = vmatprep.subr.mxu0 0.0
    %339 = vmatpush1.msra.mxu0 0.0
    %340 = vmatprep.subr.mxu0 0.0
    %341 = vmatpush1.msra.mxu0 0.0
    %342 = vmatprep.subr.mxu0 0.0
    %343 = vmatpush1.msra.mxu0 0.0
    %344 = vmatprep.subr.mxu0 0.0
    %345 = vmatpush1.msra.mxu0 0.0
    %346 = vmatprep.subr.mxu0 0.0
    %347 = vmatpush1.msra.mxu0 0.0
    %348 = vmatprep.subr.mxu0 0.0
    %349 = vmatpush1.msra.mxu0 0.0
    %350 = vmatprep.subr.mxu0 0.0
    %351 = vmatpush1.msra.mxu0 %v43
    %352 = vmatprep.subr.mxu0 0.0
    %353 = vmatpush1.msra.mxu0 %v42
    %354 = vmatprep.subr.mxu0 0.0
    %355 = vmatpush1.msra.mxu0 %v41
    %356 = vmatprep.subr.mxu0 0.0
    %357 = vmatpush1.msra.mxu0 %v40
    %358 = vmatprep.subr.mxu0 0.0
    %359 = vmatpush1.msra.mxu0 %v39
    %360 = vmatprep.subr.mxu0 0.0
    %361 = vmatpush1.msra.mxu0 %v38
    %362 = vmatprep.subr.mxu0 0.0
    %363 = vmatpush1.msra.mxu0 %v37
    %364 = vmatprep.subr.mxu0 0.0
    %365 = vmatpush1.msra.mxu0 %v36
    %366 = vmatprep.subr.mxu0 0.0
    %367 = vmatpush2.msra.mxu0 0.0
    %368 = vmatprep.subr.mxu0 0.0
    %369 = vmatpush2.msra.mxu0 0.0
    %370 = vmatprep.subr.mxu0 0.0
    %371 = vmatpush2.msra.mxu0 0.0
    %372 = vmatprep.subr.mxu0 0.0
    %373 = vmatpush2.msra.mxu0 0.0
    %374 = vmatprep.subr.mxu0 0.0
    %375 = vmatpush2.msra.mxu0 0.0
    %376 = vmatprep.subr.mxu0 0.0
    %377 = vmatpush2.msra.mxu0 0.0
    %378 = vmatprep.subr.mxu0 0.0
    %379 = vmatpush2.msra.mxu0 0.0
    %380 = vmatprep.subr.mxu0 0.0
    %381 = vmatpush2.msra.mxu0 0.0
    %382 = vmatprep.subr.mxu0 0.0
    %383 = vmatpush2.msra.mxu0 0.0
    %384 = vmatprep.subr.mxu0 0.0
    %385 = vmatpush2.msra.mxu0 0.0
    %386 = vmatprep.subr.mxu0 0.0
    %387 = vmatpush2.msra.mxu0 0.0
    %388 = vmatprep.subr.mxu0 0.0
    %389 = vmatpush2.msra.mxu0 0.0
    %390 = vmatprep.subr.mxu0 0.0
    %391 = vmatpush2.msra.mxu0 0.0
    %392 = vmatprep.subr.mxu0 0.0
    %393 = vmatpush2.msra.mxu0 0.0
    %394 = vmatprep.subr.mxu0 0.0
    %395 = vmatpush2.msra.mxu0 0.0
    %396 = vmatprep.subr.mxu0 0.0
    %397 = vmatpush2.msra.mxu0 0.0
    %398 = vmatprep.mubr.f32.mxu0 0.0
    %399 = vmatmul.mubr.f32.gmra.mxu0 %v332
    %v400 = vpop.f32.mrf.mxu0
    %v401 = vadd.f32 %v330, %v400
    %v402 = vpop.f32.mrf.mxu0
    %403 = vdwg.mxu0
    %vm404 = vcmask 517120
    %405 = vst.msk [vmem:[#allocation4] sm:$0x3] %vm404, %v401
    %v406 = vlaneseq
    %v407 = vshrl.u32 %v406, 7
    %v408 = vadd.s32 %v407, 8
    %v409 = vadd.s32 %v407, 16
    %vm410 = vcmp.lt.s32.totalorder %v407, 17
    %vm411 = vcmp.lt.s32.totalorder %v408, 17
    %vm412 = vcmp.lt.s32.totalorder %v409, 17
    %v413 = vsel %vm410, 0.0, -1e+30
    %v414 = vsel %vm411, 0.0, -1e+30
    %v415 = vsel %vm412, 0.0, -1e+30
    %v416 = vld [vmem:[#allocation2] sm:$0xff]
    %v417 = vld [vmem:[#allocation2 + $0x8] sm:$0xff]
    %v418 = vld [vmem:[#allocation2 + $0x10] sm:$0xff]
    %v419 = vld [vmem:[#allocation3] sm:$0xff]
    %v420 = vld [vmem:[#allocation3 + $0x8] sm:$0xff]
    %v421 = vld [vmem:[#allocation3 + $0x10] sm:$0xff]
    %v422 = vld [vmem:[#allocation4] sm:$0x1]
    %v423 = vlaneseq
    %v424 = vshrl.u32 %v423, 7
    %v425 = vsub.s32 0, %v424
    %v426 = vrot.slane %v422, %v425
    %v427 = vmul.f32 %v426, %v416
    %v428 = vmul.f32 %v426, %v417
    %v429 = vmul.f32 %v426, %v418
    %v431 = vsel %vm102, %v427, 0
    %v434 = vsel %vm102, %v428, 0
    %v437 = vsel %vm102, %v429, 0
    %439 = vmatprep.subr.mxu0 0.0
    %440 = vmatpush1.msra.mxu0 0.0
    %441 = vmatprep.subr.mxu0 0.0
    %442 = vmatpush1.msra.mxu0 0.0
    %443 = vmatprep.subr.mxu0 0.0
    %444 = vmatpush1.msra.mxu0 0.0
    %445 = vmatprep.subr.mxu0 0.0
    %446 = vmatpush1.msra.mxu0 0.0
    %447 = vmatprep.subr.mxu0 0.0
    %448 = vmatpush1.msra.mxu0 0.0
    %449 = vmatprep.subr.mxu0 0.0
    %450 = vmatpush1.msra.mxu0 0.0
    %451 = vmatprep.subr.mxu0 0.0
    %452 = vmatpush1.msra.mxu0 0.0
    %453 = vmatprep.subr.mxu0 0.0
    %454 = vmatpush1.msra.mxu0 0.0
    %455 = vmatprep.subr.mxu0 0.0
    %456 = vmatpush1.msra.mxu0 %v75
    %457 = vmatprep.subr.mxu0 0.0
    %458 = vmatpush1.msra.mxu0 %v74
    %459 = vmatprep.subr.mxu0 0.0
    %460 = vmatpush1.msra.mxu0 %v73
    %461 = vmatprep.subr.mxu0 0.0
    %462 = vmatpush1.msra.mxu0 %v72
    %463 = vmatprep.subr.mxu0 0.0
    %464 = vmatpush1.msra.mxu0 %v71
    %465 = vmatprep.subr.mxu0 0.0
    %466 = vmatpush1.msra.mxu0 %v70
    %467 = vmatprep.subr.mxu0 0.0
    %468 = vmatpush1.msra.mxu0 %v69
    %469 = vmatprep.subr.mxu0 0.0
    %470 = vmatpush1.msra.mxu0 %v68
    %471 = vmatprep.subr.mxu0 0.0
    %472 = vmatpush2.msra.mxu0 0.0
    %473 = vmatprep.subr.mxu0 0.0
    %474 = vmatpush2.msra.mxu0 0.0
    %475 = vmatprep.subr.mxu0 0.0
    %476 = vmatpush2.msra.mxu0 0.0
    %477 = vmatprep.subr.mxu0 0.0
    %478 = vmatpush2.msra.mxu0 0.0
    %479 = vmatprep.subr.mxu0 0.0
    %480 = vmatpush2.msra.mxu0 0.0
    %481 = vmatprep.subr.mxu0 0.0
    %482 = vmatpush2.msra.mxu0 0.0
    %483 = vmatprep.subr.mxu0 0.0
    %484 = vmatpush2.msra.mxu0 0.0
    %485 = vmatprep.subr.mxu0 0.0
    %486 = vmatpush2.msra.mxu0 0.0
    %487 = vmatprep.subr.mxu0 0.0
    %488 = vmatpush2.msra.mxu0 0.0
    %489 = vmatprep.subr.mxu0 0.0
    %490 = vmatpush2.msra.mxu0 0.0
    %491 = vmatprep.subr.mxu0 0.0
    %492 = vmatpush2.msra.mxu0 0.0
    %493 = vmatprep.subr.mxu0 0.0
    %494 = vmatpush2.msra.mxu0 0.0
    %495 = vmatprep.subr.mxu0 0.0
    %496 = vmatpush2.msra.mxu0 0.0
    %497 = vmatprep.subr.mxu0 0.0
    %498 = vmatpush2.msra.mxu0 0.0
    %499 = vmatprep.subr.mxu0 0.0
    %500 = vmatpush2.msra.mxu0 0.0
    %501 = vmatprep.subr.mxu0 0.0
    %502 = vmatpush2.msra.mxu0 0.0
    %503 = vmatprep.mubr.f32.mxu0 0.0
    %504 = vmatmul.mubr.f32.gmra.mxu0 %v431
    %v505 = vpop.f32.mrf.mxu0
    %v506 = vadd.f32 %v413, %v505
    %v507 = vpop.f32.mrf.mxu0
    %508 = vmatprep.mubr.f32.mxu0 0.0
    %509 = vmatmul.mubr.f32.gmra.mxu0 %v434
    %v510 = vpop.f32.mrf.mxu0
    %v511 = vadd.f32 %v414, %v510
    %v512 = vpop.f32.mrf.mxu0
    %513 = vmatprep.mubr.f32.mxu0 0.0
    %514 = vmatmul.mubr.f32.gmra.mxu0 %v437
    %v515 = vpop.f32.mrf.mxu0
    %v516 = vadd.f32 %v415, %v515
    %v517 = vpop.f32.mrf.mxu0
    %518 = vdwg.mxu0
    %vm519 = vcmask 64512
    %v520 = vsel %vm519, %v506, -inf
    %v521 = vsel %vm519, %v511, -inf
    %v522 = vsel %vm519, %v516, -inf
    %v523 = vmax.f32 %v520, %v521
    %v524 = vmax.f32 %v523, %v522
    %v525 = vrot.slane %v524, 4
    %v526 = vmax.f32 %v524, %v525
    %v527 = vrot.slane %v526, 2
    %v528 = vmax.f32 %v526, %v527
    %v529 = vrot.slane %v528, 1
    %v530 = vmax.f32 %v528, %v529
    %v531 = vsub.f32 %v506, %v530
    %v532 = vsub.f32 %v511, %v530
    %v533 = vsub.f32 %v516, %v530
    %v534 = vmul.f32 %v531, 1.442695
    %v535 = vpow.pop %v534
    %v536 = vmul.f32 %v532, 1.442695
    %v537 = vpow.pop %v536
    %v538 = vmul.f32 %v533, 1.442695
    %v539 = vpow.pop %v538
    %v540 = vsel %vm519, %v535, 0.0
    %v541 = vsel %vm519, %v537, 0.0
    %v542 = vadd.f32 %v540, %v541
    %v543 = vsel %vm519, %v539, 0.0
    %v544 = vadd.f32 %v542, %v543
    %v545 = vrot.slane %v544, 4
    %v546 = vadd.f32 %v544, %v545
    %v547 = vrot.slane %v546, 2
    %v548 = vadd.f32 %v546, %v547
    %v549 = vrot.slane %v548, 1
    %v550 = vadd.f32 %v548, %v549
    %v551 = vrcp.pop %v550
    %v552 = vmul.f32 %v535, %v551
    %v553 = vmul.f32 %v537, %v551
    %v554 = vmul.f32 %v539, %v551
    %v556 = vsel %vm519, %v552, 0
    %v559 = vsel %vm519, %v553, 0
    %v562 = vsel %vm519, %v554, 0
    %564 = vmatprep.subr.mxu0 0.0
    %565 = vmatpush1.msra.mxu0 0.0
    %566 = vmatprep.subr.mxu0 0.0
    %567 = vmatpush1.msra.mxu0 0.0
    %568 = vmatprep.subr.mxu0 0.0
    %569 = vmatpush1.msra.mxu0 0.0
    %570 = vmatprep.subr.mxu0 0.0
    %571 = vmatpush1.msra.mxu0 0.0
    %572 = vmatprep.subr.mxu0 0.0
    %573 = vmatpush1.msra.mxu0 0.0
    %574 = vmatprep.subr.mxu0 0.0
    %575 = vmatpush1.msra.mxu0 0.0
    %576 = vmatprep.subr.mxu0 0.0
    %577 = vmatpush1.msra.mxu0 0.0
    %578 = vmatprep.subr.mxu0 0.0
    %579 = vmatpush1.msra.mxu0 0.0
    %580 = vmatprep.subr.mxu0 0.0
    %581 = vmatpush1.msra.mxu0 0.0
    %582 = vmatprep.subr.mxu0 0.0
    %583 = vmatpush1.msra.mxu0 0.0
    %584 = vmatprep.subr.mxu0 0.0
    %585 = vmatpush1.msra.mxu0 0.0
    %586 = vmatprep.subr.mxu0 0.0
    %587 = vmatpush1.msra.mxu0 0.0
    %588 = vmatprep.subr.mxu0 0.0
    %589 = vmatpush1.msra.mxu0 0.0
    %590 = vmatprep.subr.mxu0 0.0
    %591 = vmatpush1.msra.mxu0 0.0
    %592 = vmatprep.subr.mxu0 0.0
    %593 = vmatpush1.msra.mxu0 0.0
    %594 = vmatprep.subr.mxu0 0.0
    %595 = vmatpush1.msra.mxu0 %v76
    %596 = vmatprep.subr.mxu0 0.0
    %597 = vmatpush2.msra.mxu0 0.0
    %598 = vmatprep.subr.mxu0 0.0
    %599 = vmatpush2.msra.mxu0 0.0
    %600 = vmatprep.subr.mxu0 0.0
    %601 = vmatpush2.msra.mxu0 0.0
    %602 = vmatprep.subr.mxu0 0.0
    %603 = vmatpush2.msra.mxu0 0.0
    %604 = vmatprep.subr.mxu0 0.0
    %605 = vmatpush2.msra.mxu0 0.0
    %606 = vmatprep.subr.mxu0 0.0
    %607 = vmatpush2.msra.mxu0 0.0
    %608 = vmatprep.subr.mxu0 0.0
    %609 = vmatpush2.msra.mxu0 0.0
    %610 = vmatprep.subr.mxu0 0.0
    %611 = vmatpush2.msra.mxu0 0.0
    %612 = vmatprep.subr.mxu0 0.0
    %613 = vmatpush2.msra.mxu0 0.0
    %614 = vmatprep.subr.mxu0 0.0
    %615 = vmatpush2.msra.mxu0 0.0
    %616 = vmatprep.subr.mxu0 0.0
    %617 = vmatpush2.msra.mxu0 0.0
    %618 = vmatprep.subr.mxu0 0.0
    %619 = vmatpush2.msra.mxu0 0.0
    %620 = vmatprep.subr.mxu0 0.0
    %621 = vmatpush2.msra.mxu0 0.0
    %622 = vmatprep.subr.mxu0 0.0
    %623 = vmatpush2.msra.mxu0 0.0
    %624 = vmatprep.subr.mxu0 0.0
    %625 = vmatpush2.msra.mxu0 0.0
    %626 = vmatprep.subr.mxu0 0.0
    %627 = vmatpush2.msra.mxu0 0.0
    %628 = vmatprep.mubr.f32.mxu0 0.0
    %629 = vmatmul.mubr.f32.gmra.mxu0 %v556
    %v630 = vpop.f32.mrf.mxu0
    %v631 = vadd.f32 0.0, %v630
    %v632 = vpop.f32.mrf.mxu0
    %633 = vmatprep.mubr.f32.mxu0 0.0
    %634 = vmatmul.mubr.f32.gmra.mxu0 %v559
    %v635 = vpop.f32.mrf.mxu0
    %v636 = vadd.f32 0.0, %v635
    %v637 = vpop.f32.mrf.mxu0
    %638 = vmatprep.mubr.f32.mxu0 0.0
    %639 = vmatmul.mubr.f32.gmra.mxu0 %v562
    %v640 = vpop.f32.mrf.mxu0
    %v641 = vadd.f32 0.0, %v640
    %v642 = vpop.f32.mrf.mxu0
    %643 = vdwg.mxu0
    %v644 = vmul.f32 %v631, %v419
    %v645 = vmul.f32 %v636, %v420
    %v646 = vmul.f32 %v641, %v421
    %v647 = vsel %vm102, %v644, 0.0
    %v648 = vsel %vm102, %v645, 0.0
    %v649 = vadd.f32 %v647, %v648
    %v650 = vsel %vm102, %v646, 0.0
    %v651 = vadd.f32 %v649, %v650
    %v652 = vrot.slane %v651, 4
    %v653 = vadd.f32 %v651, %v652
    %v654 = vrot.slane %v653, 2
    %v655 = vadd.f32 %v653, %v654
    %v656 = vrot.slane %v655, 1
    %v657 = vadd.f32 %v655, %v656
    %vm658 = vcmask 516096
    %659 = vst.msk [vmem:[#allocation5] sm:$0x1] %vm658, %v657
    %v660 = vld [vmem:[#allocation2 + $0x18] sm:$0xff]
    %v661 = vld [vmem:[#allocation2 + $0x20] sm:$0xff]
    %v662 = vld [vmem:[#allocation2 + $0x28] sm:$0xff]
    %v663 = vld [vmem:[#allocation3 + $0x18] sm:$0xff]
    %v664 = vld [vmem:[#allocation3 + $0x20] sm:$0xff]
    %v665 = vld [vmem:[#allocation3 + $0x28] sm:$0xff]
    %v666 = vld [vmem:[#allocation4 + $0x1] sm:$0x1]
    %v667 = vlaneseq
    %v668 = vshrl.u32 %v667, 7
    %v669 = vsub.s32 0, %v668
    %v670 = vrot.slane %v666, %v669
    %v671 = vmul.f32 %v670, %v660
    %v672 = vmul.f32 %v670, %v661
    %v673 = vmul.f32 %v670, %v662
    %v675 = vsel %vm102, %v671, 0
    %v678 = vsel %vm102, %v672, 0
    %v681 = vsel %vm102, %v673, 0
    %683 = vmatprep.subr.mxu0 0.0
    %684 = vmatpush1.msra.mxu0 0.0
    %685 = vmatprep.subr.mxu0 0.0
    %686 = vmatpush1.msra.mxu0 0.0
    %687 = vmatprep.subr.mxu0 0.0
    %688 = vmatpush1.msra.mxu0 0.0
    %689 = vmatprep.subr.mxu0 0.0
    %690 = vmatpush1.msra.mxu0 0.0
    %691 = vmatprep.subr.mxu0 0.0
    %692 = vmatpush1.msra.mxu0 0.0
    %693 = vmatprep.subr.mxu0 0.0
    %694 = vmatpush1.msra.mxu0 0.0
    %695 = vmatprep.subr.mxu0 0.0
    %696 = vmatpush1.msra.mxu0 0.0
    %697 = vmatprep.subr.mxu0 0.0
    %698 = vmatpush1.msra.mxu0 0.0
    %699 = vmatprep.subr.mxu0 0.0
    %700 = vmatpush1.msra.mxu0 %v75
    %701 = vmatprep.subr.mxu0 0.0
    %702 = vmatpush1.msra.mxu0 %v74
    %703 = vmatprep.subr.mxu0 0.0
    %704 = vmatpush1.msra.mxu0 %v73
    %705 = vmatprep.subr.mxu0 0.0
    %706 = vmatpush1.msra.mxu0 %v72
    %707 = vmatprep.subr.mxu0 0.0
    %708 = vmatpush1.msra.mxu0 %v71
    %709 = vmatprep.subr.mxu0 0.0
    %710 = vmatpush1.msra.mxu0 %v70
    %711 = vmatprep.subr.mxu0 0.0
    %712 = vmatpush1.msra.mxu0 %v69
    %713 = vmatprep.subr.mxu0 0.0
    %714 = vmatpush1.msra.mxu0 %v68
    %715 = vmatprep.subr.mxu0 0.0
    %716 = vmatpush2.msra.mxu0 0.0
    %717 = vmatprep.subr.mxu0 0.0
    %718 = vmatpush2.msra.mxu0 0.0
    %719 = vmatprep.subr.mxu0 0.0
    %720 = vmatpush2.msra.mxu0 0.0
    %721 = vmatprep.subr.mxu0 0.0
    %722 = vmatpush2.msra.mxu0 0.0
    %723 = vmatprep.subr.mxu0 0.0
    %724 = vmatpush2.msra.mxu0 0.0
    %725 = vmatprep.subr.mxu0 0.0
    %726 = vmatpush2.msra.mxu0 0.0
    %727 = vmatprep.subr.mxu0 0.0
    %728 = vmatpush2.msra.mxu0 0.0
    %729 = vmatprep.subr.mxu0 0.0
    %730 = vmatpush2.msra.mxu0 0.0
    %731 = vmatprep.subr.mxu0 0.0
    %732 = vmatpush2.msra.mxu0 0.0
    %733 = vmatprep.subr.mxu0 0.0
    %734 = vmatpush2.msra.mxu0 0.0
    %735 = vmatprep.subr.mxu0 0.0
    %736 = vmatpush2.msra.mxu0 0.0
    %737 = vmatprep.subr.mxu0 0.0
    %738 = vmatpush2.msra.mxu0 0.0
    %739 = vmatprep.subr.mxu0 0.0
    %740 = vmatpush2.msra.mxu0 0.0
    %741 = vmatprep.subr.mxu0 0.0
    %742 = vmatpush2.msra.mxu0 0.0
    %743 = vmatprep.subr.mxu0 0.0
    %744 = vmatpush2.msra.mxu0 0.0
    %745 = vmatprep.subr.mxu0 0.0
    %746 = vmatpush2.msra.mxu0 0.0
    %747 = vmatprep.mubr.f32.mxu0 0.0
    %748 = vmatmul.mubr.f32.gmra.mxu0 %v675
    %v749 = vpop.f32.mrf.mxu0
    %v750 = vadd.f32 %v413, %v749
    %v751 = vpop.f32.mrf.mxu0
    %752 = vmatprep.mubr.f32.mxu0 0.0
    %753 = vmatmul.mubr.f32.gmra.mxu0 %v678
    %v754 = vpop.f32.mrf.mxu0
    %v755 = vadd.f32 %v414, %v754
    %v756 = vpop.f32.mrf.mxu0
    %757 = vmatprep.mubr.f32.mxu0 0.0
    %758 = vmatmul.mubr.f32.gmra.mxu0 %v681
    %v759 = vpop.f32.mrf.mxu0
    %v760 = vadd.f32 %v415, %v759
    %v761 = vpop.f32.mrf.mxu0
    %762 = vdwg.mxu0
    %v763 = vsel %vm519, %v750, -inf
    %v764 = vsel %vm519, %v755, -inf
    %v765 = vsel %vm519, %v760, -inf
    %v766 = vmax.f32 %v763, %v764
    %v767 = vmax.f32 %v766, %v765
    %v768 = vrot.slane %v767, 4
    %v769 = vmax.f32 %v767, %v768
    %v770 = vrot.slane %v769, 2
    %v771 = vmax.f32 %v769, %v770
    %v772 = vrot.slane %v771, 1
    %v773 = vmax.f32 %v771, %v772
    %v774 = vsub.f32 %v750, %v773
    %v775 = vsub.f32 %v755, %v773
    %v776 = vsub.f32 %v760, %v773
    %v777 = vmul.f32 %v774, 1.442695
    %v778 = vpow.pop %v777
    %v779 = vmul.f32 %v775, 1.442695
    %v780 = vpow.pop %v779
    %v781 = vmul.f32 %v776, 1.442695
    %v782 = vpow.pop %v781
    %v783 = vsel %vm519, %v778, 0.0
    %v784 = vsel %vm519, %v780, 0.0
    %v785 = vadd.f32 %v783, %v784
    %v786 = vsel %vm519, %v782, 0.0
    %v787 = vadd.f32 %v785, %v786
    %v788 = vrot.slane %v787, 4
    %v789 = vadd.f32 %v787, %v788
    %v790 = vrot.slane %v789, 2
    %v791 = vadd.f32 %v789, %v790
    %v792 = vrot.slane %v791, 1
    %v793 = vadd.f32 %v791, %v792
    %v794 = vrcp.pop %v793
    %v795 = vmul.f32 %v778, %v794
    %v796 = vmul.f32 %v780, %v794
    %v797 = vmul.f32 %v782, %v794
    %v799 = vsel %vm519, %v795, 0
    %v802 = vsel %vm519, %v796, 0
    %v805 = vsel %vm519, %v797, 0
    %807 = vmatprep.subr.mxu0 0.0
    %808 = vmatpush1.msra.mxu0 0.0
    %809 = vmatprep.subr.mxu0 0.0
    %810 = vmatpush1.msra.mxu0 0.0
    %811 = vmatprep.subr.mxu0 0.0
    %812 = vmatpush1.msra.mxu0 0.0
    %813 = vmatprep.subr.mxu0 0.0
    %814 = vmatpush1.msra.mxu0 0.0
    %815 = vmatprep.subr.mxu0 0.0
    %816 = vmatpush1.msra.mxu0 0.0
    %817 = vmatprep.subr.mxu0 0.0
    %818 = vmatpush1.msra.mxu0 0.0
    %819 = vmatprep.subr.mxu0 0.0
    %820 = vmatpush1.msra.mxu0 0.0
    %821 = vmatprep.subr.mxu0 0.0
    %822 = vmatpush1.msra.mxu0 0.0
    %823 = vmatprep.subr.mxu0 0.0
    %824 = vmatpush1.msra.mxu0 0.0
    %825 = vmatprep.subr.mxu0 0.0
    %826 = vmatpush1.msra.mxu0 0.0
    %827 = vmatprep.subr.mxu0 0.0
    %828 = vmatpush1.msra.mxu0 0.0
    %829 = vmatprep.subr.mxu0 0.0
    %830 = vmatpush1.msra.mxu0 0.0
    %831 = vmatprep.subr.mxu0 0.0
    %832 = vmatpush1.msra.mxu0 0.0
    %833 = vmatprep.subr.mxu0 0.0
    %834 = vmatpush1.msra.mxu0 0.0
    %835 = vmatprep.subr.mxu0 0.0
    %836 = vmatpush1.msra.mxu0 0.0
    %837 = vmatprep.subr.mxu0 0.0
    %838 = vmatpush1.msra.mxu0 %v76
    %839 = vmatprep.subr.mxu0 0.0
    %840 = vmatpush2.msra.mxu0 0.0
    %841 = vmatprep.subr.mxu0 0.0
    %842 = vmatpush2.msra.mxu0 0.0
    %843 = vmatprep.subr.mxu0 0.0
    %844 = vmatpush2.msra.mxu0 0.0
    %845 = vmatprep.subr.mxu0 0.0
    %846 = vmatpush2.msra.mxu0 0.0
    %847 = vmatprep.subr.mxu0 0.0
    %848 = vmatpush2.msra.mxu0 0.0
    %849 = vmatprep.subr.mxu0 0.0
    %850 = vmatpush2.msra.mxu0 0.0
    %851 = vmatprep.subr.mxu0 0.0
    %852 = vmatpush2.msra.mxu0 0.0
    %853 = vmatprep.subr.mxu0 0.0
    %854 = vmatpush2.msra.mxu0 0.0
    %855 = vmatprep.subr.mxu0 0.0
    %856 = vmatpush2.msra.mxu0 0.0
    %857 = vmatprep.subr.mxu0 0.0
    %858 = vmatpush2.msra.mxu0 0.0
    %859 = vmatprep.subr.mxu0 0.0
    %860 = vmatpush2.msra.mxu0 0.0
    %861 = vmatprep.subr.mxu0 0.0
    %862 = vmatpush2.msra.mxu0 0.0
    %863 = vmatprep.subr.mxu0 0.0
    %864 = vmatpush2.msra.mxu0 0.0
    %865 = vmatprep.subr.mxu0 0.0
    %866 = vmatpush2.msra.mxu0 0.0
    %867 = vmatprep.subr.mxu0 0.0
    %868 = vmatpush2.msra.mxu0 0.0
    %869 = vmatprep.subr.mxu0 0.0
    %870 = vmatpush2.msra.mxu0 0.0
    %871 = vmatprep.mubr.f32.mxu0 0.0
    %872 = vmatmul.mubr.f32.gmra.mxu0 %v799
    %v873 = vpop.f32.mrf.mxu0
    %v874 = vadd.f32 0.0, %v873
    %v875 = vpop.f32.mrf.mxu0
    %876 = vmatprep.mubr.f32.mxu0 0.0
    %877 = vmatmul.mubr.f32.gmra.mxu0 %v802
    %v878 = vpop.f32.mrf.mxu0
    %v879 = vadd.f32 0.0, %v878
    %v880 = vpop.f32.mrf.mxu0
    %881 = vmatprep.mubr.f32.mxu0 0.0
    %882 = vmatmul.mubr.f32.gmra.mxu0 %v805
    %v883 = vpop.f32.mrf.mxu0
    %v884 = vadd.f32 0.0, %v883
    %v885 = vpop.f32.mrf.mxu0
    %886 = vdwg.mxu0
    %v887 = vmul.f32 %v874, %v663
    %v888 = vmul.f32 %v879, %v664
    %v889 = vmul.f32 %v884, %v665
    %v890 = vsel %vm102, %v887, 0.0
    %v891 = vsel %vm102, %v888, 0.0
    %v892 = vadd.f32 %v890, %v891
    %v893 = vsel %vm102, %v889, 0.0
    %v894 = vadd.f32 %v892, %v893
    %v895 = vrot.slane %v894, 4
    %v896 = vadd.f32 %v894, %v895
    %v897 = vrot.slane %v896, 2
    %v898 = vadd.f32 %v896, %v897
    %v899 = vrot.slane %v898, 1
    %v900 = vadd.f32 %v898, %v899
    %901 = vst.msk [vmem:[#allocation5 + $0x1] sm:$0x1] %vm658, %v900
    %v902 = vld [vmem:[#allocation5] sm:$0x3]
    %v903 = vlaneseq
    %v904 = vshrl.u32 %v903, 7
    %v905 = vsub.s32 0, %v904
    %v906 = vrot.slane %v88, %v905
    %v908 = vsel %vm102, %v902, 0
    %910 = vmatprep.subr.mxu0 0.0
    %911 = vmatpush1.msra.mxu0 0.0
    %912 = vmatprep.subr.mxu0 0.0
    %913 = vmatpush1.msra.mxu0 0.0
    %914 = vmatprep.subr.mxu0 0.0
    %915 = vmatpush1.msra.mxu0 0.0
    %916 = vmatprep.subr.mxu0 0.0
    %917 = vmatpush1.msra.mxu0 0.0
    %918 = vmatprep.subr.mxu0 0.0
    %919 = vmatpush1.msra.mxu0 0.0
    %920 = vmatprep.subr.mxu0 0.0
    %921 = vmatpush1.msra.mxu0 0.0
    %922 = vmatprep.subr.mxu0 0.0
    %923 = vmatpush1.msra.mxu0 0.0
    %924 = vmatprep.subr.mxu0 0.0
    %925 = vmatpush1.msra.mxu0 0.0
    %926 = vmatprep.subr.mxu0 0.0
    %927 = vmatpush1.msra.mxu0 %v67
    %928 = vmatprep.subr.mxu0 0.0
    %929 = vmatpush1.msra.mxu0 %v66
    %930 = vmatprep.subr.mxu0 0.0
    %931 = vmatpush1.msra.mxu0 %v65
    %932 = vmatprep.subr.mxu0 0.0
    %933 = vmatpush1.msra.mxu0 %v64
    %934 = vmatprep.subr.mxu0 0.0
    %935 = vmatpush1.msra.mxu0 %v63
    %936 = vmatprep.subr.mxu0 0.0
    %937 = vmatpush1.msra.mxu0 %v62
    %938 = vmatprep.subr.mxu0 0.0
    %939 = vmatpush1.msra.mxu0 %v61
    %940 = vmatprep.subr.mxu0 0.0
    %941 = vmatpush1.msra.mxu0 %v60
    %942 = vmatprep.subr.mxu0 0.0
    %943 = vmatpush2.msra.mxu0 0.0
    %944 = vmatprep.subr.mxu0 0.0
    %945 = vmatpush2.msra.mxu0 0.0
    %946 = vmatprep.subr.mxu0 0.0
    %947 = vmatpush2.msra.mxu0 0.0
    %948 = vmatprep.subr.mxu0 0.0
    %949 = vmatpush2.msra.mxu0 0.0
    %950 = vmatprep.subr.mxu0 0.0
    %951 = vmatpush2.msra.mxu0 0.0
    %952 = vmatprep.subr.mxu0 0.0
    %953 = vmatpush2.msra.mxu0 0.0
    %954 = vmatprep.subr.mxu0 0.0
    %955 = vmatpush2.msra.mxu0 0.0
    %956 = vmatprep.subr.mxu0 0.0
    %957 = vmatpush2.msra.mxu0 0.0
    %958 = vmatprep.subr.mxu0 0.0
    %959 = vmatpush2.msra.mxu0 0.0
    %960 = vmatprep.subr.mxu0 0.0
    %961 = vmatpush2.msra.mxu0 0.0
    %962 = vmatprep.subr.mxu0 0.0
    %963 = vmatpush2.msra.mxu0 0.0
    %964 = vmatprep.subr.mxu0 0.0
    %965 = vmatpush2.msra.mxu0 0.0
    %966 = vmatprep.subr.mxu0 0.0
    %967 = vmatpush2.msra.mxu0 0.0
    %968 = vmatprep.subr.mxu0 0.0
    %969 = vmatpush2.msra.mxu0 0.0
    %970 = vmatprep.subr.mxu0 0.0
    %971 = vmatpush2.msra.mxu0 0.0
    %972 = vmatprep.subr.mxu0 0.0
    %973 = vmatpush2.msra.mxu0 0.0
    %974 = vmatprep.mubr.f32.mxu0 0.0
    %975 = vmatmul.mubr.f32.gmra.mxu0 %v908
    %v976 = vpop.f32.mrf.mxu0
    %v977 = vadd.f32 %v906, %v976
    %v978 = vpop.f32.mrf.mxu0
    %979 = vdwg.mxu0
    %v980 = vadd.f32 %v97, %v977
    %v982 = vsel %vm102, %v980, 0
    %984 = vmatprep.subr.mxu0 0.0
    %985 = vmatpush1.msra.mxu0 0.0
    %986 = vmatprep.subr.mxu0 0.0
    %987 = vmatpush1.msra.mxu0 0.0
    %988 = vmatprep.subr.mxu0 0.0
    %989 = vmatpush1.msra.mxu0 0.0
    %990 = vmatprep.subr.mxu0 0.0
    %991 = vmatpush1.msra.mxu0 0.0
    %992 = vmatprep.subr.mxu0 0.0
    %993 = vmatpush1.msra.mxu0 0.0
    %994 = vmatprep.subr.mxu0 0.0
    %995 = vmatpush1.msra.mxu0 0.0
    %996 = vmatprep.subr.mxu0 0.0
    %997 = vmatpush1.msra.mxu0 0.0
    %998 = vmatprep.subr.mxu0 0.0
    %999 = vmatpush1.msra.mxu0 0.0
    %1000 = vmatprep.subr.mxu0 0.0
    %1001 = vmatpush1.msra.mxu0 %v84
    %1002 = vmatprep.subr.mxu0 0.0
    %1003 = vmatpush1.msra.mxu0 %v83
    %1004 = vmatprep.subr.mxu0 0.0
    %1005 = vmatpush1.msra.mxu0 %v82
    %1006 = vmatprep.subr.mxu0 0.0
    %1007 = vmatpush1.msra.mxu0 %v81
    %1008 = vmatprep.subr.mxu0 0.0
    %1009 = vmatpush1.msra.mxu0 %v80
    %1010 = vmatprep.subr.mxu0 0.0
    %1011 = vmatpush1.msra.mxu0 %v79
    %1012 = vmatprep.subr.mxu0 0.0
    %1013 = vmatpush1.msra.mxu0 %v78
    %1014 = vmatprep.subr.mxu0 0.0
    %1015 = vmatpush1.msra.mxu0 %v77
    %1016 = vmatprep.subr.mxu0 0.0
    %1017 = vmatpush2.msra.mxu0 0.0
    %1018 = vmatprep.subr.mxu0 0.0
    %1019 = vmatpush2.msra.mxu0 0.0
    %1020 = vmatprep.subr.mxu0 0.0
    %1021 = vmatpush2.msra.mxu0 0.0
    %1022 = vmatprep.subr.mxu0 0.0
    %1023 = vmatpush2.msra.mxu0 0.0
    %1024 = vmatprep.subr.mxu0 0.0
    %1025 = vmatpush2.msra.mxu0 0.0
    %1026 = vmatprep.subr.mxu0 0.0
    %1027 = vmatpush2.msra.mxu0 0.0
    %1028 = vmatprep.subr.mxu0 0.0
    %1029 = vmatpush2.msra.mxu0 0.0
    %1030 = vmatprep.subr.mxu0 0.0
    %1031 = vmatpush2.msra.mxu0 0.0
    %1032 = vmatprep.subr.mxu0 0.0
    %1033 = vmatpush2.msra.mxu0 0.0
    %1034 = vmatprep.subr.mxu0 0.0
    %1035 = vmatpush2.msra.mxu0 0.0
    %1036 = vmatprep.subr.mxu0 0.0
    %1037 = vmatpush2.msra.mxu0 0.0
    %1038 = vmatprep.subr.mxu0 0.0
    %1039 = vmatpush2.msra.mxu0 0.0
    %1040 = vmatprep.subr.mxu0 0.0
    %1041 = vmatpush2.msra.mxu0 0.0
    %1042 = vmatprep.subr.mxu0 0.0
    %1043 = vmatpush2.msra.mxu0 0.0
    %1044 = vmatprep.subr.mxu0 0.0
    %1045 = vmatpush2.msra.mxu0 0.0
    %1046 = vmatprep.subr.mxu0 0.0
    %1047 = vmatpush2.msra.mxu0 0.0
    %1048 = vmatprep.mubr.f32.mxu0 0.0
    %1049 = vmatmul.mubr.f32.gmra.mxu0 %v982
    %v1050 = vpop.f32.mrf.mxu0
    %v1051 = vadd.f32 0.0, %v1050
    %v1052 = vpop.f32.mrf.mxu0
    %1053 = vdwg.mxu0
    %v1054 = vsub.f32 %v980, %v1051
    %v1055 = vmul.f32 %v1054, %v1054
    %v1057 = vsel %vm102, %v1055, 0
    %1059 = vmatprep.subr.mxu0 0.0
    %1060 = vmatpush1.msra.mxu0 0.0
    %1061 = vmatprep.subr.mxu0 0.0
    %1062 = vmatpush1.msra.mxu0 0.0
    %1063 = vmatprep.subr.mxu0 0.0
    %1064 = vmatpush1.msra.mxu0 0.0
    %1065 = vmatprep.subr.mxu0 0.0
    %1066 = vmatpush1.msra.mxu0 0.0
    %1067 = vmatprep.subr.mxu0 0.0
    %1068 = vmatpush1.msra.mxu0 0.0
    %1069 = vmatprep.subr.mxu0 0.0
    %1070 = vmatpush1.msra.mxu0 0.0
    %1071 = vmatprep.subr.mxu0 0.0
    %1072 = vmatpush1.msra.mxu0 0.0
    %1073 = vmatprep.subr.mxu0 0.0
    %1074 = vmatpush1.msra.mxu0 0.0
    %1075 = vmatprep.subr.mxu0 0.0
    %1076 = vmatpush1.msra.mxu0 %v84
    %1077 = vmatprep.subr.mxu0 0.0
    %1078 = vmatpush1.msra.mxu0 %v83
    %1079 = vmatprep.subr.mxu0 0.0
    %1080 = vmatpush1.msra.mxu0 %v82
    %1081 = vmatprep.subr.mxu0 0.0
    %1082 = vmatpush1.msra.mxu0 %v81
    %1083 = vmatprep.subr.mxu0 0.0
    %1084 = vmatpush1.msra.mxu0 %v80
    %1085 = vmatprep.subr.mxu0 0.0
    %1086 = vmatpush1.msra.mxu0 %v79
    %1087 = vmatprep.subr.mxu0 0.0
    %1088 = vmatpush1.msra.mxu0 %v78
    %1089 = vmatprep.subr.mxu0 0.0
    %1090 = vmatpush1.msra.mxu0 %v77
    %1091 = vmatprep.subr.mxu0 0.0
    %1092 = vmatpush2.msra.mxu0 0.0
    %1093 = vmatprep.subr.mxu0 0.0
    %1094 = vmatpush2.msra.mxu0 0.0
    %1095 = vmatprep.subr.mxu0 0.0
    %1096 = vmatpush2.msra.mxu0 0.0
    %1097 = vmatprep.subr.mxu0 0.0
    %1098 = vmatpush2.msra.mxu0 0.0
    %1099 = vmatprep.subr.mxu0 0.0
    %1100 = vmatpush2.msra.mxu0 0.0
    %1101 = vmatprep.subr.mxu0 0.0
    %1102 = vmatpush2.msra.mxu0 0.0
    %1103 = vmatprep.subr.mxu0 0.0
    %1104 = vmatpush2.msra.mxu0 0.0
    %1105 = vmatprep.subr.mxu0 0.0
    %1106 = vmatpush2.msra.mxu0 0.0
    %1107 = vmatprep.subr.mxu0 0.0
    %1108 = vmatpush2.msra.mxu0 0.0
    %1109 = vmatprep.subr.mxu0 0.0
    %1110 = vmatpush2.msra.mxu0 0.0
    %1111 = vmatprep.subr.mxu0 0.0
    %1112 = vmatpush2.msra.mxu0 0.0
    %1113 = vmatprep.subr.mxu0 0.0
    %1114 = vmatpush2.msra.mxu0 0.0
    %1115 = vmatprep.subr.mxu0 0.0
    %1116 = vmatpush2.msra.mxu0 0.0
    %1117 = vmatprep.subr.mxu0 0.0
    %1118 = vmatpush2.msra.mxu0 0.0
    %1119 = vmatprep.subr.mxu0 0.0
    %1120 = vmatpush2.msra.mxu0 0.0
    %1121 = vmatprep.subr.mxu0 0.0
    %1122 = vmatpush2.msra.mxu0 0.0
    %1123 = vmatprep.mubr.f32.mxu0 0.0
    %1124 = vmatmul.mubr.f32.gmra.mxu0 %v1057
    %v1125 = vpop.f32.mrf.mxu0
    %v1126 = vadd.f32 1e-05, %v1125
    %v1127 = vpop.f32.mrf.mxu0
    %1128 = vdwg.mxu0
    %v1129 = vrsqrt.pop %v1126
    %v1130 = vmul.f32 %v1054, %v1129
    %v1131 = vlaneseq
    %v1132 = vshrl.u32 %v1131, 7
    %v1133 = vsub.s32 0, %v1132
    %v1134 = vrot.slane %v89, %v1133
    %v1135 = vmul.f32 %v1130, %v1134
    %v1136 = vlaneseq
    %v1137 = vshrl.u32 %v1136, 7
    %v1138 = vsub.s32 0, %v1137
    %v1139 = vrot.slane %v90, %v1138
    %v1140 = vadd.f32 %v1135, %v1139
    %1141 = vst.msk [vmem:[#allocation6] sm:$0x3] %vm404, %v1140
    // Predicated region
    $region42: #{multi_head_map_attention_v2.1} parent=1 // pred_check
      _
    $region43: #{multi_head_map_attention_v2.1} parent=1 // pred_check_branch
      %1143 = sbr.rel (0) target = $region45
    $region44: #{multi_head_map_attention_v2.1} parent=1 // pred_region
      %s1145 = ssub.s32 32, 32
      %1146 = vsyncadd [#allocation7], %s1145
      %s1148 = sshll.u32 [#allocation6], 4
      %s1149 = int_to_ptr.vmem [resolvable:$true] %s1148
      %1151 = dma.vmem_to_hbm [thread:$0]  %s1149, 32, %s10, [#allocation7]
    $region45: #{multi_head_map_attention_v2.1} parent=1 // pred_fallthru
      _
    // Predicated region
    $region46: #{multi_head_map_attention_v2.1} parent=1 // pred_check
      _
    $region47: #{multi_head_map_attention_v2.1} parent=1 // pred_check_branch
      %1153 = sbr.rel (0) target = $region49
    $region48: #{multi_head_map_attention_v2.1} parent=1 // pred_region
      %1154 = dma.done [#allocation7], 32
    $region49: #{multi_head_map_attention_v2.1} parent=1 // pred_fallthru
      _
    %1155 = vsyncpa [#allocation7], 1

</llo_original>
